<compile_context>
chip_gen: v7x
topology: tpu7x:2x2x1
jax: 0.10.0
libtpu: 0.0.40
codegen_flags: <defaults>
</compile_context>

<pallas_src>
import functools

import jax
import jax.numpy as jnp
from jax.experimental import pallas as pl
from jax.experimental.pallas import tpu as pltpu

EXPANSION = 4
_BF16_SUBLANE = 16           # bf16 packs 2/sublane -> native tile is (16, 128)
_DEFAULT_VMEM_CAP = 64 * 1024 * 1024


def _vmem_limit_bytes():
    """Half of physical VMEM: ~64 MiB on v5e/v6e (128 MiB), ~32 MiB on v7x."""
    try:
        cap = getattr(pltpu.get_tpu_info(), "vmem_capacity_bytes", _DEFAULT_VMEM_CAP)
    except Exception:  # pragma: no cover - conservative fallback
        cap = _DEFAULT_VMEM_CAP
    return min(cap // 2, 96 * 1024 * 1024)


def _compiler_params(dimension_semantics):
    return pltpu.CompilerParams(
        dimension_semantics=dimension_semantics,
        vmem_limit_bytes=_vmem_limit_bytes(),
    )


def _round_up(x, m):
    return -(-x // m) * m


def _pick_tile_m(M, preferred=512):
    """M tile: <= preferred rows, multiple of 8, and >=2 grid steps when M > 8."""
    if M <= 8:
        return M
    tm = min(preferred, M)
    if tm >= M:                       # avoid degenerate single-step grid
        tm = -(-M // 2)               # ceil(M/2)
    tm = _round_up(tm, 8)
    return min(tm, M)


def _pick_row_tile(Ho, Wo_pad, target_rows=256, min_split_rows=128):
    """Output-row tile for the 3x3 kernel: divides Ho, bounded per-step rows,
    and splits spatially (>= 2 row tiles) unless the whole image is tiny."""
    divisors = [d for d in range(1, Ho + 1) if Ho % d == 0]
    cands = [d for d in divisors if d * Wo_pad <= target_rows] or [1]
    th = max(cands)
    if th == Ho and Ho * Wo_pad > min_split_rows:
        smaller = [d for d in cands if d < Ho]
        if smaller:
            th = max(smaller)
    return th


# ----------------------------------------------------------------------------
# Pallas kernels
# ----------------------------------------------------------------------------
def _mm_bn_kernel(x_ref, w_ref, s_ref, b_ref, o_ref, *, relu):
    """o = act((x @ w) * scale + shift); bf16 operands, f32 MXU accumulate."""
    acc = jnp.dot(x_ref[...], w_ref[...], preferred_element_type=jnp.float32)
    y = acc * s_ref[...] + b_ref[...]
    if relu:
        y = jnp.maximum(y, 0.0)
    o_ref[...] = y.astype(o_ref.dtype)


def _conv3x3_bn_relu_kernel(x_ref, w_ref, s_ref, b_ref, o_ref, *, taps, th, wo, kc):
    """3x3 conv as 3 wide-K (K = 3*Cin) matmuls over dy, dx pre-concatenated.

    x_ref: (1, Sy, Hr, Wo_pad, 3*Cin) bf16 padded / parity+dx-im2col image
           (one sample, VMEM-resident across row tiles).
    w_ref: (3, 3*Cin, Cout) bf16.  o_ref: (1, th*Wo_pad, Cout) bf16.
    """
    r0 = pl.multiple_of(pl.program_id(1) * th, th)   # output-row offset of this tile
    acc = None
    for dy, (plane, oy) in enumerate(taps):
        patch = x_ref[0, plane, pl.ds(oy + r0, th), :, :]    # (th, Wo_pad, 3C) bf16
        patch = patch.reshape(th * wo, kc)                   # layout-free: wo % 16 == 0
        part = jnp.dot(patch, w_ref[dy], preferred_element_type=jnp.float32)
        acc = part if acc is None else acc + part
    y = acc * s_ref[...] + b_ref[...]
    o_ref[0] = jnp.maximum(y, 0.0).astype(o_ref.dtype)


def _tail_identity_kernel(x_ref, w_ref, s_ref, b_ref, r_ref, o_ref):
    """o = relu((x @ w3) * s3 + b3 + residual)."""
    acc = jnp.dot(x_ref[...], w_ref[...], preferred_element_type=jnp.float32)
    y = acc * s_ref[...] + b_ref[...] + r_ref[...].astype(jnp.float32)
    o_ref[...] = jnp.maximum(y, 0.0).astype(o_ref.dtype)


def _tail_proj_kernel(x_ref, w_ref, s_ref, b_ref,
                      xs_ref, ws_ref, ss_ref, bs_ref, o_ref):
    """o = relu((x @ w3)*s3 + b3 + (xs @ ws)*ss + bs) -- shortcut conv fused."""
    acc = jnp.dot(x_ref[...], w_ref[...], preferred_element_type=jnp.float32)
    y = acc * s_ref[...] + b_ref[...]
    sc = jnp.dot(xs_ref[...], ws_ref[...], preferred_element_type=jnp.float32)
    y = y + sc * ss_ref[...] + bs_ref[...]
    o_ref[...] = jnp.maximum(y, 0.0).astype(o_ref.dtype)


# ----------------------------------------------------------------------------
# pallas_call wrappers
# ----------------------------------------------------------------------------
def matmul_bn_act(x, w, scale, shift, relu=True, out_dtype=jnp.bfloat16):
    """y = act((x @ w) * scale + shift).  x: (M, K) bf16, w: (K, Cout)."""
    M, K = x.shape
    Cout = w.shape[1]
    tm = _pick_tile_m(M)
    return pl.pallas_call(
        functools.partial(_mm_bn_kernel, relu=relu),
        out_shape=jax.ShapeDtypeStruct((M, Cout), out_dtype),
        grid=(pl.cdiv(M, tm),),
        in_specs=[
            pl.BlockSpec((tm, K), lambda i: (i, 0)),
            pl.BlockSpec((K, Cout), lambda i: (0, 0)),
            pl.BlockSpec((1, Cout), lambda i: (0, 0)),
            pl.BlockSpec((1, Cout), lambda i: (0, 0)),
        ],
        out_specs=pl.BlockSpec((tm, Cout), lambda i: (i, 0)),
        compiler_params=_compiler_params(("parallel",)),
    )(x, w.astype(jnp.bfloat16),
      scale.reshape(1, Cout).astype(jnp.float32),
      shift.reshape(1, Cout).astype(jnp.float32))


def conv3x3_bn_relu(x, w, scale, shift, stride):
    """Conv2d(3x3, stride, padding=1, bias=False) + BN affine + ReLU.

    x: (N, H, W, Cin) bf16 NHWC.  w: (3, 3, Cin, Cout).
    Returns (N, Ho, Wo, Cout) bf16.
    """
    N, H, W, C = x.shape
    Cout = w.shape[-1]
    Ho = (H - 1) // stride + 1
    Wo = (W - 1) // stride + 1
    Wo_pad = _round_up(Wo, _BF16_SUBLANE)   # layout-free in-kernel reshape for bf16

    xp = jnp.pad(x, ((0, 0), (1, 1), (1, 1), (0, 0)))      # conv padding=1 (zeros)
    Hp = H + 2

    # dx-direction im2col (3x lane concat) so the kernel needs no W shifts.
    if stride == 1:
        cols = [xp[:, :, dx:dx + Wo, :] for dx in range(3)]
    elif stride == 2:
        assert H % 2 == 0 and W % 2 == 0, "stride=2 path requires even H, W"
        cols = [xp[:, :, dx::2, :][:, :, :Wo, :] for dx in range(3)]
    else:
        raise NotImplementedError(f"stride={stride}")
    xw = jnp.concatenate(cols, axis=-1)                     # (N, Hp, Wo, 3C) bf16
    if Wo_pad != Wo:
        xw = jnp.pad(xw, ((0, 0), (0, 0), (0, Wo_pad - Wo), (0, 0)))

    if stride == 1:
        xc = xw[:, None]                                    # (N, 1, Hp, Wo_pad, 3C)
        taps = tuple((0, dy) for dy in range(3))            # (plane, oy) per dy
    else:
        # Split H by parity so every dy tap is an unstrided slice on an untiled dim.
        xc = xw.reshape(N, Hp // 2, 2, Wo_pad, 3 * C).transpose(0, 2, 1, 3, 4)
        taps = tuple((dy % 2, dy // 2) for dy in range(3))

    Sy, Hr = xc.shape[1], xc.shape[2]
    # Weight slab: (dy, dx*Cin + c, Cout) -- matches the lane-concat order above.
    w_slab = w.astype(jnp.bfloat16).reshape(3, 3 * C, Cout)

    th = _pick_row_tile(Ho, Wo_pad)
    grid = (N, Ho // th)

    out = pl.pallas_call(
        functools.partial(_conv3x3_bn_relu_kernel,
                          taps=taps, th=th, wo=Wo_pad, kc=3 * C),
        out_shape=jax.ShapeDtypeStruct((N, Ho * Wo_pad, Cout), jnp.bfloat16),
        grid=grid,
        in_specs=[
            pl.BlockSpec((1, Sy, Hr, Wo_pad, 3 * C), lambda n, r: (n, 0, 0, 0, 0)),
            pl.BlockSpec((3, 3 * C, Cout), lambda n, r: (0, 0, 0)),
            pl.BlockSpec((1, Cout), lambda n, r: (0, 0)),
            pl.BlockSpec((1, Cout), lambda n, r: (0, 0)),
        ],
        out_specs=pl.BlockSpec((1, th * Wo_pad, Cout), lambda n, r: (n, r, 0)),
        compiler_params=_compiler_params(("parallel", "arbitrary")),
    )(xc, w_slab,
      scale.reshape(1, Cout).astype(jnp.float32),
      shift.reshape(1, Cout).astype(jnp.float32))

    out = out.reshape(N, Ho, Wo_pad, Cout)
    if Wo_pad != Wo:
        out = out[:, :, :Wo, :]
    return out


def bottleneck_tail(x2d, w3, s3, b3, shortcut):
    """Fused conv3(1x1) + bn3 + shortcut + ReLU.

    shortcut = ('identity', residual2d_bf16) or ('proj', xs2d_bf16, ws, ss, bs).
    """
    M, K = x2d.shape
    Cout = w3.shape[1]
    tm = _pick_tile_m(M)
    grid = (pl.cdiv(M, tm),)
    if shortcut[0] == 'identity':
        r2d = shortcut[1]
        return pl.pallas_call(
            _tail_identity_kernel,
            out_shape=jax.ShapeDtypeStruct((M, Cout), jnp.float32),
            grid=grid,
            in_specs=[
                pl.BlockSpec((tm, K), lambda i: (i, 0)),
                pl.BlockSpec((K, Cout), lambda i: (0, 0)),
                pl.BlockSpec((1, Cout), lambda i: (0, 0)),
                pl.BlockSpec((1, Cout), lambda i: (0, 0)),
                pl.BlockSpec((tm, Cout), lambda i: (i, 0)),
            ],
            out_specs=pl.BlockSpec((tm, Cout), lambda i: (i, 0)),
            compiler_params=_compiler_params(("parallel",)),
        )(x2d, w3.astype(jnp.bfloat16),
          s3.reshape(1, Cout).astype(jnp.float32),
          b3.reshape(1, Cout).astype(jnp.float32), r2d)
    else:
        _, xs2d, ws, ss, bs = shortcut
        Ks = xs2d.shape[1]
        return pl.pallas_call(
            _tail_proj_kernel,
            out_shape=jax.ShapeDtypeStruct((M, Cout), jnp.float32),
            grid=grid,
            in_specs=[
                pl.BlockSpec((tm, K), lambda i: (i, 0)),
                pl.BlockSpec((K, Cout), lambda i: (0, 0)),
                pl.BlockSpec((1, Cout), lambda i: (0, 0)),
                pl.BlockSpec((1, Cout), lambda i: (0, 0)),
                pl.BlockSpec((tm, Ks), lambda i: (i, 0)),
                pl.BlockSpec((Ks, Cout), lambda i: (0, 0)),
                pl.BlockSpec((1, Cout), lambda i: (0, 0)),
                pl.BlockSpec((1, Cout), lambda i: (0, 0)),
            ],
            out_specs=pl.BlockSpec((tm, Cout), lambda i: (i, 0)),
            compiler_params=_compiler_params(("parallel",)),
        )(x2d, w3.astype(jnp.bfloat16),
          s3.reshape(1, Cout).astype(jnp.float32),
          b3.reshape(1, Cout).astype(jnp.float32),
          xs2d, ws.astype(jnp.bfloat16),
          ss.reshape(1, Cout).astype(jnp.float32),
          bs.reshape(1, Cout).astype(jnp.float32))


# ----------------------------------------------------------------------------
# Parameters (PyTorch layout) + forward passes
# ----------------------------------------------------------------------------
def make_bottleneck_params(key, in_planes, planes, stride):
    def conv_w(k, cout, cin, ksize):
        fan_in = cin * ksize * ksize
        return (jax.random.normal(k, (cout, cin, ksize, ksize), jnp.float32)
                * (2.0 / fan_in) ** 0.5)

    def bn(k, c):
        kg, kb, km, kv = jax.random.split(k, 4)
        return {
            'gamma': 1.0 + 0.1 * jax.random.normal(kg, (c,), jnp.float32),
            'beta': 0.1 * jax.random.normal(kb, (c,), jnp.float32),
            'mean': 0.1 * jax.random.normal(km, (c,), jnp.float32),
            'var': 1.0 + 0.1 * jnp.abs(jax.random.normal(kv, (c,), jnp.float32)),
        }

    ks = jax.random.split(key, 8)
    out_planes = EXPANSION * planes
    p = {
        'stride': stride,
        'conv1': conv_w(ks[0], planes, in_planes, 1), 'bn1': bn(ks[1], planes),
        'conv2': conv_w(ks[2], planes, planes, 3),    'bn2': bn(ks[3], planes),
        'conv3': conv_w(ks[4], out_planes, planes, 1), 'bn3': bn(ks[5], out_planes),
    }
    if stride != 1 or in_planes != out_planes:
        p['conv_sc'] = conv_w(ks[6], out_planes, in_planes, 1)
        p['bn_sc'] = bn(ks[7], out_planes)
    return p


def _fold_bn(bn, eps=1e-5):
    scale = bn['gamma'] / jnp.sqrt(bn['var'] + eps)
    shift = bn['beta'] - bn['mean'] * scale
    return scale, shift


def bottleneck_forward_pallas(p, x_nchw):
    stride = p['stride']
    # NHWC + single bf16 cast up front (x feeds conv1 and the shortcut).
    x = jnp.transpose(x_nchw, (0, 2, 3, 1)).astype(jnp.bfloat16)
    N, H, W, Cin = x.shape

    # conv1 (1x1) + bn1 + relu -> h1 stored bf16 (halves HBM traffic)
    s1, b1 = _fold_bn(p['bn1'])
    planes = p['conv1'].shape[0]
    w1 = p['conv1'].reshape(planes, Cin).T                        # (Cin, planes)
    h1 = matmul_bn_act(x.reshape(N * H * W, Cin), w1, s1, b1, relu=True)
    h1 = h1.reshape(N, H, W, planes)

    # conv2 (3x3, stride) + bn2 + relu -- 3 wide-K matmuls per row tile
    s2, b2 = _fold_bn(p['bn2'])
    w2 = jnp.transpose(p['conv2'], (2, 3, 1, 0))                  # (3,3,Cin2,Cout2)
    h2 = conv3x3_bn_relu(h1, w2, s2, b2, stride)                  # (N,Ho,Wo,planes) bf16
    _, Ho, Wo, _ = h2.shape
    M2 = N * Ho * Wo
    h2 = h2.reshape(M2, planes)

    # conv3 (1x1) + bn3 + shortcut + relu (all fused in one kernel)
    s3, b3 = _fold_bn(p['bn3'])
    out_planes = p['conv3'].shape[0]
    w3 = p['conv3'].reshape(out_planes, planes).T                 # (planes, out_planes)
    if 'conv_sc' in p:
        ssc, bsc = _fold_bn(p['bn_sc'])
        wsc = p['conv_sc'].reshape(out_planes, Cin).T             # (Cin, out_planes)
        xs = x[:, ::stride, ::stride, :].reshape(M2, Cin)
        y = bottleneck_tail(h2, w3, s3, b3, ('proj', xs, wsc, ssc, bsc))
    else:
        r = x.reshape(M2, Cin)                                    # identity shortcut
        y = bottleneck_tail(h2, w3, s3, b3, ('identity', r))

    y = y.reshape(N, Ho, Wo, out_planes)
    return jnp.transpose(y, (0, 3, 1, 2))                         # back to NCHW


def bottleneck_forward_reference(p, x_nchw):
    """Pure-JAX (XLA conv, f32) reference of the same inference-mode forward."""
    eps = 1e-5

    def conv(x, w, stride, padding):
        return jax.lax.conv_general_dilated(
            x, w, (stride, stride),
            ((padding, padding), (padding, padding)),
            dimension_numbers=('NCHW', 'OIHW', 'NCHW'))

    def bn(x, b):
        s = b['gamma'] / jnp.sqrt(b['var'] + eps)
        sh = b['beta'] - b['mean'] * s
        return x * s[None, :, None, None] + sh[None, :, None, None]

    stride = p['stride']
    out = jax.nn.relu(bn(conv(x_nchw, p['conv1'], 1, 0), p['bn1']))
    out = jax.nn.relu(bn(conv(out, p['conv2'], stride, 1), p['bn2']))
    out = bn(conv(out, p['conv3'], 1, 0), p['bn3'])
    if 'conv_sc' in p:
        sc = bn(conv(x_nchw, p['conv_sc'], stride, 0), p['bn_sc'])
    else:
        sc = x_nchw
    return jax.nn.relu(out + sc)


if __name__ == "__main__":
    key = jax.random.PRNGKey(0)
    kx1, kx2, kp1, kp2 = jax.random.split(key, 4)

    # Small shapes; planes=32 makes the fused tail (conv3 + shortcut) 128 lanes
    # wide (lane-dense stores).  Two configs exercise both shortcut paths.
    N, H, W = 2, 16, 16
    configs = [
        # identity shortcut: in_planes == 4*planes, stride 1
        dict(in_planes=128, planes=32, stride=1, kx=kx1, kp=kp1),
        # projection shortcut: stride 2
        dict(in_planes=64,  planes=32, stride=2, kx=kx2, kp=kp2),
    ]

    for cfg in configs:
        x = jax.random.normal(cfg['kx'], (N, cfg['in_planes'], H, W), jnp.float32)
        params = make_bottleneck_params(cfg['kp'], cfg['in_planes'],
                                        cfg['planes'], cfg['stride'])
        fwd = jax.jit(functools.partial(bottleneck_forward_pallas, params))
        y = fwd(x)
        jax.block_until_ready(y)
        ref = bottleneck_forward_reference(params, x)
        assert y.shape == ref.shape, (y.shape, ref.shape)
        assert bool(jnp.all(jnp.isfinite(y)))
        rel_err = float(jnp.max(jnp.abs(y - ref)) /
                        (jnp.max(jnp.abs(ref)) + 1e-6))
        assert rel_err < 2e-2, rel_err  # bf16 MXU/activations vs f32 XLA reference

    print("KERNEL_OK")
</pallas_src>

<mosaic_0001>
module attributes {stable_mosaic.version = 11 : i64} {
  func.func @_mm_bn_kernel(%arg0: i32, %arg1: memref<256x128xbf16, #tpu.memory_space<vmem>>, %arg2: memref<128x32xbf16, #tpu.memory_space<vmem>>, %arg3: memref<1x32xf32, #tpu.memory_space<vmem>>, %arg4: memref<1x32xf32, #tpu.memory_space<vmem>>, %arg5: memref<256x32xbf16, #tpu.memory_space<vmem>>) attributes {dimension_semantics = [#tpu.dimension_semantics<parallel>], iteration_bounds = array<i64: 2>, scalar_prefetch = 0 : i64, scratch_operands = 0 : i64, tpu.core_type = #tpu.core_type<tc>, window_params = [{transform_indices = @transform_0, window_bounds = array<i64: 256, 128>}, {pipeline_mode = #tpu.pipeline_mode<synchronous>, transform_indices = @transform_1, window_bounds = array<i64: 128, 32>}, {pipeline_mode = #tpu.pipeline_mode<synchronous>, transform_indices = @transform_2, window_bounds = array<i64: 1, 32>}, {pipeline_mode = #tpu.pipeline_mode<synchronous>, transform_indices = @transform_3, window_bounds = array<i64: 1, 32>}, {transform_indices = @transform_4, window_bounds = array<i64: 256, 32>}]} {
    %c0 = arith.constant 0 : index
    %c0_0 = arith.constant 0 : index
    %0 = vector.load %arg1[%c0, %c0_0] : memref<256x128xbf16, #tpu.memory_space<vmem>>, vector<256x128xbf16>
    %c0_1 = arith.constant 0 : index
    %c0_2 = arith.constant 0 : index
    %1 = vector.load %arg2[%c0_1, %c0_2] : memref<128x32xbf16, #tpu.memory_space<vmem>>, vector<128x32xbf16>
    %cst = arith.constant dense<0.000000e+00> : vector<256x32xf32>
    %2 = tpu.matmul %0, %1, %cst {dimension_numbers = #tpu.dot_dimension_numbers<[1], [0], [0], [1], [0, 0, 1, 1], [], []>} : vector<256x128xbf16>, vector<128x32xbf16>, vector<256x32xf32> -> vector<256x32xf32>
    %c0_3 = arith.constant 0 : index
    %c0_4 = arith.constant 0 : index
    %3 = vector.load %arg3[%c0_3, %c0_4] : memref<1x32xf32, #tpu.memory_space<vmem>>, vector<1x32xf32>
    %4 = vector.broadcast %3 : vector<1x32xf32> to vector<256x32xf32>
    %5 = arith.mulf %2, %4 : vector<256x32xf32>
    %c0_5 = arith.constant 0 : index
    %c0_6 = arith.constant 0 : index
    %6 = vector.load %arg4[%c0_5, %c0_6] : memref<1x32xf32, #tpu.memory_space<vmem>>, vector<1x32xf32>
    %7 = vector.broadcast %6 : vector<1x32xf32> to vector<256x32xf32>
    %8 = arith.addf %5, %7 : vector<256x32xf32>
    %cst_7 = arith.constant 0.000000e+00 : f32
    %9 = vector.broadcast %cst_7 : f32 to vector<256x32xf32>
    %10 = arith.maximumf %8, %9 : vector<256x32xf32>
    %11 = arith.truncf %10 : vector<256x32xf32> to vector<256x32xbf16>
    %c0_8 = arith.constant 0 : index
    %c0_9 = arith.constant 0 : index
    %12 = vector.load %arg5[%c0_8, %c0_9] : memref<256x32xbf16, #tpu.memory_space<vmem>>, vector<256x32xbf16>
    tpu.vector_store %arg5[%c0_8, %c0_9], %11 {strides = array<i32>} : memref<256x32xbf16, #tpu.memory_space<vmem>>, vector<256x32xbf16>,
    return
  }
  func.func @transform_0(%arg0: i32) -> (i32, i32) {
    %c0_i32 = arith.constant 0 : i32
    %c0_i32_0 = arith.constant 0 : i32
    return %arg0, %c0_i32 : i32, i32
  }
  func.func @transform_1(%arg0: i32) -> (i32, i32) {
    %c0_i32 = arith.constant 0 : i32
    %c0_i32_0 = arith.constant 0 : i32
    %c0_i32_1 = arith.constant 0 : i32
    return %c0_i32, %c0_i32_0 : i32, i32
  }
  func.func @transform_2(%arg0: i32) -> (i32, i32) {
    %c0_i32 = arith.constant 0 : i32
    %c0_i32_0 = arith.constant 0 : i32
    %c0_i32_1 = arith.constant 0 : i32
    return %c0_i32, %c0_i32_0 : i32, i32
  }
  func.func @transform_3(%arg0: i32) -> (i32, i32) {
    %c0_i32 = arith.constant 0 : i32
    %c0_i32_0 = arith.constant 0 : i32
    %c0_i32_1 = arith.constant 0 : i32
    return %c0_i32, %c0_i32_0 : i32, i32
  }
  func.func @transform_4(%arg0: i32) -> (i32, i32) {
    %c0_i32 = arith.constant 0 : i32
    %c0_i32_0 = arith.constant 0 : i32
    return %arg0, %c0_i32 : i32, i32
  }
}

module attributes {stable_mosaic.version = 11 : i64} {
  func.func @_conv3x3_bn_relu_kernel(%arg0: i32, %arg1: i32, %arg2: memref<1x1x18x16x96xbf16, #tpu.memory_space<vmem>>, %arg3: memref<3x96x32xbf16, #tpu.memory_space<vmem>>, %arg4: memref<1x32xf32, #tpu.memory_space<vmem>>, %arg5: memref<1x32xf32, #tpu.memory_space<vmem>>, %arg6: memref<1x128x32xbf16, #tpu.memory_space<vmem>>) attributes {dimension_semantics = [#tpu.dimension_semantics<parallel>, #tpu.dimension_semantics<arbitrary>], iteration_bounds = array<i64: 2, 2>, scalar_prefetch = 0 : i64, scratch_operands = 0 : i64, tpu.core_type = #tpu.core_type<tc>, window_params = [{transform_indices = @transform_0, window_bounds = array<i64: 1, 1, 18, 16, 96>}, {pipeline_mode = #tpu.pipeline_mode<synchronous>, transform_indices = @transform_1, window_bounds = array<i64: 3, 96, 32>}, {pipeline_mode = #tpu.pipeline_mode<synchronous>, transform_indices = @transform_2, window_bounds = array<i64: 1, 32>}, {pipeline_mode = #tpu.pipeline_mode<synchronous>, transform_indices = @transform_3, window_bounds = array<i64: 1, 32>}, {transform_indices = @transform_4, window_bounds = array<i64: 1, 128, 32>}]} {
    %c8_i32 = arith.constant 8 : i32
    %0 = arith.muli %arg1, %c8_i32 : i32
    %1 = tpu.assume_multiple %0, 8 : i32
    %c0_i32 = arith.constant 0 : i32
    %2 = arith.addi %c0_i32, %1 : i32
    %c0 = arith.constant 0 : index
    %c0_0 = arith.constant 0 : index
    %3 = arith.index_cast %2 : i32 to index
    %c0_1 = arith.constant 0 : index
    %c0_2 = arith.constant 0 : index
    %4 = vector.load %arg2[%c0, %c0_0, %3, %c0_1, %c0_2] : memref<1x1x18x16x96xbf16, #tpu.memory_space<vmem>>, vector<1x1x8x16x96xbf16>
    %5 = vector.shape_cast %4 : vector<1x1x8x16x96xbf16> to vector<8x16x96xbf16>
    %6 = vector.shape_cast %5 : vector<8x16x96xbf16> to vector<128x96xbf16>
    %c0_3 = arith.constant 0 : index
    %c0_4 = arith.constant 0 : index
    %c0_5 = arith.constant 0 : index
    %7 = vector.load %arg3[%c0_3, %c0_4, %c0_5] : memref<3x96x32xbf16, #tpu.memory_space<vmem>>, vector<1x96x32xbf16>
    %8 = vector.shape_cast %7 : vector<1x96x32xbf16> to vector<96x32xbf16>
    %cst = arith.constant dense<0.000000e+00> : vector<128x32xf32>
    %9 = tpu.matmul %6, %8, %cst {dimension_numbers = #tpu.dot_dimension_numbers<[1], [0], [0], [1], [0, 0, 1, 1], [], []>} : vector<128x96xbf16>, vector<96x32xbf16>, vector<128x32xf32> -> vector<128x32xf32>
    %c1_i32 = arith.constant 1 : i32
    %10 = arith.addi %c1_i32, %1 : i32
    %c0_6 = arith.constant 0 : index
    %c0_7 = arith.constant 0 : index
    %11 = arith.index_cast %10 : i32 to index
    %c0_8 = arith.constant 0 : index
    %c0_9 = arith.constant 0 : index
    %12 = vector.load %arg2[%c0_6, %c0_7, %11, %c0_8, %c0_9] : memref<1x1x18x16x96xbf16, #tpu.memory_space<vmem>>, vector<1x1x8x16x96xbf16>
    %13 = vector.shape_cast %12 : vector<1x1x8x16x96xbf16> to vector<8x16x96xbf16>
    %14 = vector.shape_cast %13 : vector<8x16x96xbf16> to vector<128x96xbf16>
    %c1 = arith.constant 1 : index
    %c0_10 = arith.constant 0 : index
    %c0_11 = arith.constant 0 : index
    %15 = vector.load %arg3[%c1, %c0_10, %c0_11] : memref<3x96x32xbf16, #tpu.memory_space<vmem>>, vector<1x96x32xbf16>
    %16 = vector.shape_cast %15 : vector<1x96x32xbf16> to vector<96x32xbf16>
    %cst_12 = arith.constant dense<0.000000e+00> : vector<128x32xf32>
    %17 = tpu.matmul %14, %16, %cst_12 {dimension_numbers = #tpu.dot_dimension_numbers<[1], [0], [0], [1], [0, 0, 1, 1], [], []>} : vector<128x96xbf16>, vector<96x32xbf16>, vector<128x32xf32> -> vector<128x32xf32>
    %18 = arith.addf %9, %17 : vector<128x32xf32>
    %c2_i32 = arith.constant 2 : i32
    %19 = arith.addi %c2_i32, %1 : i32
    %c0_13 = arith.constant 0 : index
    %c0_14 = arith.constant 0 : index
    %20 = arith.index_cast %19 : i32 to index
    %c0_15 = arith.constant 0 : index
    %c0_16 = arith.constant 0 : index
    %21 = vector.load %arg2[%c0_13, %c0_14, %20, %c0_15, %c0_16] : memref<1x1x18x16x96xbf16, #tpu.memory_space<vmem>>, vector<1x1x8x16x96xbf16>
    %22 = vector.shape_cast %21 : vector<1x1x8x16x96xbf16> to vector<8x16x96xbf16>
    %23 = vector.shape_cast %22 : vector<8x16x96xbf16> to vector<128x96xbf16>
    %c2 = arith.constant 2 : index
    %c0_17 = arith.constant 0 : index
    %c0_18 = arith.constant 0 : index
    %24 = vector.load %arg3[%c2, %c0_17, %c0_18] : memref<3x96x32xbf16, #tpu.memory_space<vmem>>, vector<1x96x32xbf16>
    %25 = vector.shape_cast %24 : vector<1x96x32xbf16> to vector<96x32xbf16>
    %cst_19 = arith.constant dense<0.000000e+00> : vector<128x32xf32>
    %26 = tpu.matmul %23, %25, %cst_19 {dimension_numbers = #tpu.dot_dimension_numbers<[1], [0], [0], [1], [0, 0, 1, 1], [], []>} : vector<128x96xbf16>, vector<96x32xbf16>, vector<128x32xf32> -> vector<128x32xf32>
    %27 = arith.addf %18, %26 : vector<128x32xf32>
    %c0_20 = arith.constant 0 : index
    %c0_21 = arith.constant 0 : index
    %28 = vector.load %arg4[%c0_20, %c0_21] : memref<1x32xf32, #tpu.memory_space<vmem>>, vector<1x32xf32>
    %29 = vector.broadcast %28 : vector<1x32xf32> to vector<128x32xf32>
    %30 = arith.mulf %27, %29 : vector<128x32xf32>
    %c0_22 = arith.constant 0 : index
    %c0_23 = arith.constant 0 : index
    %31 = vector.load %arg5[%c0_22, %c0_23] : memref<1x32xf32, #tpu.memory_space<vmem>>, vector<1x32xf32>
    %32 = vector.broadcast %31 : vector<1x32xf32> to vector<128x32xf32>
    %33 = arith.addf %30, %32 : vector<128x32xf32>
    %cst_24 = arith.constant 0.000000e+00 : f32
    %34 = vector.broadcast %cst_24 : f32 to vector<128x32xf32>
    %35 = arith.maximumf %33, %34 : vector<128x32xf32>
    %36 = arith.truncf %35 : vector<128x32xf32> to vector<128x32xbf16>
    %c0_25 = arith.constant 0 : index
    %c0_26 = arith.constant 0 : index
    %c0_27 = arith.constant 0 : index
    %37 = vector.load %arg6[%c0_25, %c0_26, %c0_27] : memref<1x128x32xbf16, #tpu.memory_space<vmem>>, vector<1x128x32xbf16>
    %38 = vector.shape_cast %37 : vector<1x128x32xbf16> to vector<128x32xbf16>
    %39 = vector.shape_cast %36 : vector<128x32xbf16> to vector<1x128x32xbf16>
    tpu.vector_store %arg6[%c0_25, %c0_26, %c0_27], %39 {strides = array<i32>} : memref<1x128x32xbf16, #tpu.memory_space<vmem>>, vector<1x128x32xbf16>,
    return
  }
  func.func @transform_0(%arg0: i32, %arg1: i32) -> (i32, i32, i32, i32, i32) {
    %c0_i32 = arith.constant 0 : i32
    %c0_i32_0 = arith.constant 0 : i32
    %c0_i32_1 = arith.constant 0 : i32
    %c0_i32_2 = arith.constant 0 : i32
    %c0_i32_3 = arith.constant 0 : i32
    return %arg0, %c0_i32, %c0_i32_0, %c0_i32_1, %c0_i32_2 : i32, i32, i32, i32, i32
  }
  func.func @transform_1(%arg0: i32, %arg1: i32) -> (i32, i32, i32) {
    %c0_i32 = arith.constant 0 : i32
    %c0_i32_0 = arith.constant 0 : i32
    %c0_i32_1 = arith.constant 0 : i32
    %c0_i32_2 = arith.constant 0 : i32
    return %c0_i32, %c0_i32_0, %c0_i32_1 : i32, i32, i32
  }
  func.func @transform_2(%arg0: i32, %arg1: i32) -> (i32, i32) {
    %c0_i32 = arith.constant 0 : i32
    %c0_i32_0 = arith.constant 0 : i32
    %c0_i32_1 = arith.constant 0 : i32
    return %c0_i32, %c0_i32_0 : i32, i32
  }
  func.func @transform_3(%arg0: i32, %arg1: i32) -> (i32, i32) {
    %c0_i32 = arith.constant 0 : i32
    %c0_i32_0 = arith.constant 0 : i32
    %c0_i32_1 = arith.constant 0 : i32
    return %c0_i32, %c0_i32_0 : i32, i32
  }
  func.func @transform_4(%arg0: i32, %arg1: i32) -> (i32, i32, i32) {
    %c0_i32 = arith.constant 0 : i32
    %c0_i32_0 = arith.constant 0 : i32
    return %arg0, %arg1, %c0_i32 : i32, i32, i32
  }
}

module attributes {stable_mosaic.version = 11 : i64} {
  func.func @_tail_identity_kernel(%arg0: i32, %arg1: memref<256x32xbf16, #tpu.memory_space<vmem>>, %arg2: memref<32x128xbf16, #tpu.memory_space<vmem>>, %arg3: memref<1x128xf32, #tpu.memory_space<vmem>>, %arg4: memref<1x128xf32, #tpu.memory_space<vmem>>, %arg5: memref<256x128xbf16, #tpu.memory_space<vmem>>, %arg6: memref<256x128xf32, #tpu.memory_space<vmem>>) attributes {dimension_semantics = [#tpu.dimension_semantics<parallel>], iteration_bounds = array<i64: 2>, scalar_prefetch = 0 : i64, scratch_operands = 0 : i64, tpu.core_type = #tpu.core_type<tc>, window_params = [{transform_indices = @transform_0, window_bounds = array<i64: 256, 32>}, {pipeline_mode = #tpu.pipeline_mode<synchronous>, transform_indices = @transform_1, window_bounds = array<i64: 32, 128>}, {pipeline_mode = #tpu.pipeline_mode<synchronous>, transform_indices = @transform_2, window_bounds = array<i64: 1, 128>}, {pipeline_mode = #tpu.pipeline_mode<synchronous>, transform_indices = @transform_3, window_bounds = array<i64: 1, 128>}, {transform_indices = @transform_4, window_bounds = array<i64: 256, 128>}, {transform_indices = @transform_5, window_bounds = array<i64: 256, 128>}]} {
    %c0 = arith.constant 0 : index
    %c0_0 = arith.constant 0 : index
    %0 = vector.load %arg1[%c0, %c0_0] : memref<256x32xbf16, #tpu.memory_space<vmem>>, vector<256x32xbf16>
    %c0_1 = arith.constant 0 : index
    %c0_2 = arith.constant 0 : index
    %1 = vector.load %arg2[%c0_1, %c0_2] : memref<32x128xbf16, #tpu.memory_space<vmem>>, vector<32x128xbf16>
    %cst = arith.constant dense<0.000000e+00> : vector<256x128xf32>
    %2 = tpu.matmul %0, %1, %cst {dimension_numbers = #tpu.dot_dimension_numbers<[1], [0], [0], [1], [0, 0, 1, 1], [], []>} : vector<256x32xbf16>, vector<32x128xbf16>, vector<256x128xf32> -> vector<256x128xf32>
    %c0_3 = arith.constant 0 : index
    %c0_4 = arith.constant 0 : index
    %3 = vector.load %arg3[%c0_3, %c0_4] : memref<1x128xf32, #tpu.memory_space<vmem>>, vector<1x128xf32>
    %4 = vector.broadcast %3 : vector<1x128xf32> to vector<256x128xf32>
    %5 = arith.mulf %2, %4 : vector<256x128xf32>
    %c0_5 = arith.constant 0 : index
    %c0_6 = arith.constant 0 : index
    %6 = vector.load %arg4[%c0_5, %c0_6] : memref<1x128xf32, #tpu.memory_space<vmem>>, vector<1x128xf32>
    %7 = vector.broadcast %6 : vector<1x128xf32> to vector<256x128xf32>
    %8 = arith.addf %5, %7 : vector<256x128xf32>
    %c0_7 = arith.constant 0 : index
    %c0_8 = arith.constant 0 : index
    %9 = vector.load %arg5[%c0_7, %c0_8] : memref<256x128xbf16, #tpu.memory_space<vmem>>, vector<256x128xbf16>
    %10 = arith.extf %9 : vector<256x128xbf16> to vector<256x128xf32>
    %11 = arith.addf %8, %10 : vector<256x128xf32>
    %cst_9 = arith.constant 0.000000e+00 : f32
    %12 = vector.broadcast %cst_9 : f32 to vector<256x128xf32>
    %13 = arith.maximumf %11, %12 : vector<256x128xf32>
    %c0_10 = arith.constant 0 : index
    %c0_11 = arith.constant 0 : index
    %14 = vector.load %arg6[%c0_10, %c0_11] : memref<256x128xf32, #tpu.memory_space<vmem>>, vector<256x128xf32>
    tpu.vector_store %arg6[%c0_10, %c0_11], %13 {strides = array<i32>} : memref<256x128xf32, #tpu.memory_space<vmem>>, vector<256x128xf32>,
    return
  }
  func.func @transform_0(%arg0: i32) -> (i32, i32) {
    %c0_i32 = arith.constant 0 : i32
    %c0_i32_0 = arith.constant 0 : i32
    return %arg0, %c0_i32 : i32, i32
  }
  func.func @transform_1(%arg0: i32) -> (i32, i32) {
    %c0_i32 = arith.constant 0 : i32
    %c0_i32_0 = arith.constant 0 : i32
    %c0_i32_1 = arith.constant 0 : i32
    return %c0_i32, %c0_i32_0 : i32, i32
  }
  func.func @transform_2(%arg0: i32) -> (i32, i32) {
    %c0_i32 = arith.constant 0 : i32
    %c0_i32_0 = arith.constant 0 : i32
    %c0_i32_1 = arith.constant 0 : i32
    return %c0_i32, %c0_i32_0 : i32, i32
  }
  func.func @transform_3(%arg0: i32) -> (i32, i32) {
    %c0_i32 = arith.constant 0 : i32
    %c0_i32_0 = arith.constant 0 : i32
    %c0_i32_1 = arith.constant 0 : i32
    return %c0_i32, %c0_i32_0 : i32, i32
  }
  func.func @transform_4(%arg0: i32) -> (i32, i32) {
    %c0_i32 = arith.constant 0 : i32
    %c0_i32_0 = arith.constant 0 : i32
    return %arg0, %c0_i32 : i32, i32
  }
  func.func @transform_5(%arg0: i32) -> (i32, i32) {
    %c0_i32 = arith.constant 0 : i32
    %c0_i32_0 = arith.constant 0 : i32
    return %arg0, %c0_i32 : i32, i32
  }
}

</mosaic_0001>

<llo_original>
// kernel: bottleneck_forward_pallas.3
$region0: #{bottleneck_forward_pallas.3}
  #allocation0 [shape = 'u32[]', space=smem, size = 0x4, offset = 0x4, fixed_abs, tag = 'smem constant byte address 0x4 - core index']
  #allocation1 [shape = 'u32[144,128]{1,0:T(1,128)}', space=vmem, size = 0x12000, scoped, tag = 'internal scratch']
  %s0 = inlined_call_operand.vmem [shape: bf16[512,128], index: 0, kind: input, shape index: {}]
  %s1 = inlined_call_operand.vmem [shape: bf16[128,32], index: 1, kind: input, shape index: {}]
  %s2 = inlined_call_operand.vmem [shape: f32[1,32], index: 2, kind: input, shape index: {}]
  %s3 = inlined_call_operand.vmem [shape: f32[1,32], index: 3, kind: input, shape index: {}]
  %s4 = inlined_call_operand.vmem [shape: bf16[512,32], index: 4, kind: output, shape index: {}]
  %s5 = sld [smem:[#allocation0]]
  $region49: #{bottleneck_forward_pallas.3} parent=0
    _
  %s7 = ssub.s32 1, %s5
  %s8 = scalar_select 0, %s7, %s5
  loop: start=0, step=1, limit=4
  $region2: #{bottleneck_forward_pallas.3} parent=0 // loop_pre_header
    _
  $region3: #{bottleneck_forward_pallas.3} parent=0 // loop_header
    %s10 = sphi 0, %s14
    %p11 = scmp.ge.s32.totalorder %s10, 4
    %s20 = sphi 0, %s22
    %s23 = sphi 0, %s20
    %s24 = sphi 0, %s23
    %s40 = sphi 0, %s24
    %s44 = sphi 0, %s44
    %s46 = sphi 0, %s44
    %s47 = sphi 0, %s46
    %s61 = sphi 0, %s47
    %s65 = sphi 0, %s65
    %s67 = sphi 0, %s65
    %s68 = sphi 0, %s67
    %s82 = sphi 0, %s68
    %s86 = sphi 0, %s86
    %s88 = sphi 0, %s86
    %s89 = sphi 0, %s88
    %s103 = sphi 0, %s89
    %s109 = sphi 0, %s111
    %s112 = sphi 0, %s109
    %s113 = sphi 0, %s112
    %s129 = sphi 0, %s113
  $region4: #{bottleneck_forward_pallas.3} parent=0 // loop_header_branch
    %13 = sbr.rel (%p11) target = $region8
  $region5: #{bottleneck_forward_pallas.3} parent=0 // loop_body
    %s15 = ssub.s32 %s10, 1
    %s16 = ssub.s32 %s10, 2
    %s17 = sadd.s32 %s10, 1
    %s18 = ssub.s32 %s10, %s17
    %p19 = scmp.eq.s32.totalorder %s18, 0
    %s21 = sadd.s32 %s20, 1
    %s22 = scalar_select %p19, %s20, %s21
    %p25 = pneg %p19
    %p26 = scmp.eq.s32.totalorder %s10, 1
    %p27 = por %p25, %p26
    %p28 = scmp.ne.s32.totalorder %s20, %s23
    %p29 = scmp.eq.s32.totalorder %s10, 0
    %p30 = por %p28, %p29
    %p31 = scmp.ne.s32.totalorder %s20, %s23
    %p32 = scmp.eq.s32.totalorder %s15, 1
    %p33 = por %p31, %p32
    %p34 = scmp.ne.s32.totalorder %s23, %s24
    %p35 = scmp.eq.s32.totalorder %s15, 0
    %p36 = por %p34, %p35
    %p37 = scmp.ne.s32.totalorder %s23, %s24
    %p38 = scmp.eq.s32.totalorder %s16, 1
    %p39 = por %p37, %p38
    %p41 = scmp.ne.s32.totalorder %s24, %s40
    %p42 = scmp.eq.s32.totalorder %s16, 0
    %p43 = por %p41, %p42
    %s45 = sadd.s32 %s44, 1
    %p48 = scmp.eq.s32.totalorder %s10, 1
    %p49 = scmp.ne.s32.totalorder %s44, %s46
    %p50 = scmp.eq.s32.totalorder %s10, 0
    %p51 = por %p49, %p50
    %p52 = scmp.ne.s32.totalorder %s44, %s46
    %p53 = scmp.eq.s32.totalorder %s15, 1
    %p54 = por %p52, %p53
    %p55 = scmp.ne.s32.totalorder %s46, %s47
    %p56 = scmp.eq.s32.totalorder %s15, 0
    %p57 = por %p55, %p56
    %p58 = scmp.ne.s32.totalorder %s46, %s47
    %p59 = scmp.eq.s32.totalorder %s16, 1
    %p60 = por %p58, %p59
    %p62 = scmp.ne.s32.totalorder %s47, %s61
    %p63 = scmp.eq.s32.totalorder %s16, 0
    %p64 = por %p62, %p63
    %s66 = sadd.s32 %s65, 1
    %p69 = scmp.eq.s32.totalorder %s10, 1
    %p70 = scmp.ne.s32.totalorder %s65, %s67
    %p71 = scmp.eq.s32.totalorder %s10, 0
    %p72 = por %p70, %p71
    %p73 = scmp.ne.s32.totalorder %s65, %s67
    %p74 = scmp.eq.s32.totalorder %s15, 1
    %p75 = por %p73, %p74
    %p76 = scmp.ne.s32.totalorder %s67, %s68
    %p77 = scmp.eq.s32.totalorder %s15, 0
    %p78 = por %p76, %p77
    %p79 = scmp.ne.s32.totalorder %s67, %s68
    %p80 = scmp.eq.s32.totalorder %s16, 1
    %p81 = por %p79, %p80
    %p83 = scmp.ne.s32.totalorder %s68, %s82
    %p84 = scmp.eq.s32.totalorder %s16, 0
    %p85 = por %p83, %p84
    %s87 = sadd.s32 %s86, 1
    %p90 = scmp.eq.s32.totalorder %s10, 1
    %p91 = scmp.ne.s32.totalorder %s86, %s88
    %p92 = scmp.eq.s32.totalorder %s10, 0
    %p93 = por %p91, %p92
    %p94 = scmp.ne.s32.totalorder %s86, %s88
    %p95 = scmp.eq.s32.totalorder %s15, 1
    %p96 = por %p94, %p95
    %p97 = scmp.ne.s32.totalorder %s88, %s89
    %p98 = scmp.eq.s32.totalorder %s15, 0
    %p99 = por %p97, %p98
    %p100 = scmp.ne.s32.totalorder %s88, %s89
    %p101 = scmp.eq.s32.totalorder %s16, 1
    %p102 = por %p100, %p101
    %p104 = scmp.ne.s32.totalorder %s89, %s103
    %p105 = scmp.eq.s32.totalorder %s16, 0
    %p106 = por %p104, %p105
    %s107 = ssub.s32 %s10, %s17
    %p108 = scmp.eq.s32.totalorder %s107, 0
    %s110 = sadd.s32 %s109, 1
    %s111 = scalar_select %p108, %s109, %s110
    %p114 = pneg %p108
    %p115 = scmp.eq.s32.totalorder %s10, 1
    %p116 = por %p114, %p115
    %p117 = scmp.ne.s32.totalorder %s109, %s112
    %p118 = scmp.eq.s32.totalorder %s10, 0
    %p119 = por %p117, %p118
    %p120 = scmp.ne.s32.totalorder %s109, %s112
    %p121 = scmp.eq.s32.totalorder %s15, 1
    %p122 = por %p120, %p121
    %p123 = scmp.ne.s32.totalorder %s112, %s113
    %p124 = scmp.eq.s32.totalorder %s15, 0
    %p125 = por %p123, %p124
    %p126 = scmp.ne.s32.totalorder %s112, %s113
    %p127 = scmp.eq.s32.totalorder %s16, 1
    %p128 = por %p126, %p127
    %p130 = scmp.ne.s32.totalorder %s113, %s129
    %p131 = scmp.eq.s32.totalorder %s16, 0
    %p132 = por %p130, %p131
    %p133 = scmp.le.s32.totalorder 1, %s10
    %p134 = scmp.lt.s32.totalorder %s10, 3
    %p135 = pnand %p133, %p134
    %p136 = pneg %p135
    // Predicated region
    $region9: #{bottleneck_forward_pallas.3} parent=5 // pred_check
      _
    $region10: #{bottleneck_forward_pallas.3} parent=5 // pred_check_branch
      %138 = sbr.rel (%p135) target = $region12
    $region11: #{bottleneck_forward_pallas.3} parent=5 // pred_region
      %s139 = ssub.s32 %s10, 1
      // Predicated region
      $region13: #{bottleneck_forward_pallas.3} parent=11 // pred_check
        %p140 = pneg %p57
      $region14: #{bottleneck_forward_pallas.3} parent=11 // pred_check_branch
        %142 = sbr.rel (%p140) target = $region16
      $region15: #{bottleneck_forward_pallas.3} parent=11 // pred_region
        _
      $region16: #{bottleneck_forward_pallas.3} parent=11 // pred_fallthru
        _
      // Predicated region
      $region17: #{bottleneck_forward_pallas.3} parent=11 // pred_check
        %p143 = pneg %p78
      $region18: #{bottleneck_forward_pallas.3} parent=11 // pred_check_branch
        %145 = sbr.rel (%p143) target = $region20
      $region19: #{bottleneck_forward_pallas.3} parent=11 // pred_region
        _
      $region20: #{bottleneck_forward_pallas.3} parent=11 // pred_fallthru
        _
      // Predicated region
      $region21: #{bottleneck_forward_pallas.3} parent=11 // pred_check
        %p146 = pneg %p99
      $region22: #{bottleneck_forward_pallas.3} parent=11 // pred_check_branch
        %148 = sbr.rel (%p146) target = $region24
      $region23: #{bottleneck_forward_pallas.3} parent=11 // pred_region
        _
      $region24: #{bottleneck_forward_pallas.3} parent=11 // pred_fallthru
        _
    $region12: #{bottleneck_forward_pallas.3} parent=5 // pred_fallthru
      _
    %p149 = scmp.lt.s32.totalorder %s10, 2
    // Predicated region
    $region25: #{bottleneck_forward_pallas.3} parent=5 // pred_check
      %p150 = pneg %p149
    $region26: #{bottleneck_forward_pallas.3} parent=5 // pred_check_branch
      %152 = sbr.rel (%p150) target = $region28
    $region27: #{bottleneck_forward_pallas.3} parent=5 // pred_region
      // Predicated region
      $region29: #{bottleneck_forward_pallas.3} parent=27 // pred_check
        %p153 = pneg %p30
      $region30: #{bottleneck_forward_pallas.3} parent=27 // pred_check_branch
        %155 = sbr.rel (%p153) target = $region32
      $region31: #{bottleneck_forward_pallas.3} parent=27 // pred_region
        %s156 = smul.u32 32, %s10
        %p157 = scmp.lt.s32.totalorder %s156, 63
        %s158 = scalar_select %p157, %s156, 63
        %s159 = smul.addr %s158, 4
        %s160 = scalar_lea.vmem %s0, %s159
        %s161 = smul.u32 32, %s10
      $region32: #{bottleneck_forward_pallas.3} parent=27 // pred_fallthru
        _
    $region28: #{bottleneck_forward_pallas.3} parent=5 // pred_fallthru
      _
    %p162 = scmp.le.s32.totalorder 1, %s10
    %p163 = scmp.lt.s32.totalorder %s10, 3
    %p164 = pnand %p162, %p163
    %p165 = pneg %p164
    // Predicated region
    $region33: #{bottleneck_forward_pallas.3} parent=5 // pred_check
      _
    $region34: #{bottleneck_forward_pallas.3} parent=5 // pred_check_branch
      %167 = sbr.rel (%p164) target = $region36
    $region35: #{bottleneck_forward_pallas.3} parent=5 // pred_region
      %s168 = ssub.s32 %s10, 1
      %s169 = smul.u32 32, %s15
      %p170 = scmp.lt.s32.totalorder %s169, 63
      %s171 = scalar_select %p170, %s169, 63
      %s172 = smul.addr %s171, 4
      %s173 = scalar_lea.vmem %s0, %s172
      %p174 = pneg %p36
      %p175 = pneg %p33
      %p176 = pneg %p57
      %p177 = pneg %p54
      %p178 = pneg %p78
      %p179 = pneg %p75
      %p180 = pneg %p99
      %p181 = pneg %p96
      %p182 = pneg %p125
      %p183 = pneg %p122
      %s184 = smul.u32 32, %s15
      %p185 = scmp.lt.s32.totalorder %s184, 63
      %s186 = scalar_select %p185, %s184, 63
      %s187 = smul.addr %s186, 4
      %s188 = scalar_lea.vmem %s4, %s187
      %s189 = smul.u32 32, %s15
      %p190 = scmp.lt.s32.totalorder %s189, 63
      %s191 = scalar_select %p190, %s189, 63
      %s192 = smul.addr %s191, 4
      %s193 = scalar_lea.vmem %s0, %s192
      %s194 = smul.u32 32, %s15
      %s195 = smul.u32 32, %s15
      %p196 = scmp.lt.s32.totalorder %s195, 63
      %s197 = scalar_select %p196, %s195, 63
      %s198 = smul.addr %s197, 4
      %s199 = scalar_lea.vmem %s4, %s198
      %s200 = smul.u32 32, %s15
      %v202 = vld [vmem:[%s193] sm:$0xf]
      %v203 = vld [vmem:[%s193 + $0x4] sm:$0xf]
      %v204 = vld [vmem:[%s193 + $0x8] sm:$0xf]
      %v205 = vld [vmem:[%s193 + $0xc] sm:$0xf]
      %v206 = vld [vmem:[%s193 + $0x10] sm:$0xf]
      %v207 = vld [vmem:[%s193 + $0x14] sm:$0xf]
      %v208 = vld [vmem:[%s193 + $0x18] sm:$0xf]
      %v209 = vld [vmem:[%s193 + $0x1c] sm:$0xf]
      %v210 = vld [vmem:[%s193 + $0x20] sm:$0xf]
      %v211 = vld [vmem:[%s193 + $0x24] sm:$0xf]
      %v212 = vld [vmem:[%s193 + $0x28] sm:$0xf]
      %v213 = vld [vmem:[%s193 + $0x2c] sm:$0xf]
      %v214 = vld [vmem:[%s193 + $0x30] sm:$0xf]
      %v215 = vld [vmem:[%s193 + $0x34] sm:$0xf]
      %v216 = vld [vmem:[%s193 + $0x38] sm:$0xf]
      %v217 = vld [vmem:[%s193 + $0x3c] sm:$0xf]
      %v218 = vld [vmem:[%s193 + $0x40] sm:$0xf]
      %v219 = vld [vmem:[%s193 + $0x44] sm:$0xf]
      %v220 = vld [vmem:[%s193 + $0x48] sm:$0xf]
      %v221 = vld [vmem:[%s193 + $0x4c] sm:$0xf]
      %v222 = vld [vmem:[%s193 + $0x50] sm:$0xf]
      %v223 = vld [vmem:[%s193 + $0x54] sm:$0xf]
      %v224 = vld [vmem:[%s193 + $0x58] sm:$0xf]
      %v225 = vld [vmem:[%s193 + $0x5c] sm:$0xf]
      %v226 = vld [vmem:[%s193 + $0x60] sm:$0xf]
      %v227 = vld [vmem:[%s193 + $0x64] sm:$0xf]
      %v228 = vld [vmem:[%s193 + $0x68] sm:$0xf]
      %v229 = vld [vmem:[%s193 + $0x6c] sm:$0xf]
      %v230 = vld [vmem:[%s193 + $0x70] sm:$0xf]
      %v231 = vld [vmem:[%s193 + $0x74] sm:$0xf]
      %v232 = vld [vmem:[%s193 + $0x78] sm:$0xf]
      %v233 = vld [vmem:[%s193 + $0x7c] sm:$0xf]
      %v234 = vld [vmem:[%s1] sm:$0xf]
      %v235 = vld [vmem:[%s1 + $0x4] sm:$0xf]
      %v236 = vld [vmem:[%s1 + $0x8] sm:$0xf]
      %v237 = vld [vmem:[%s1 + $0xc] sm:$0xf]
      %v238 = vld [vmem:[%s1 + $0x10] sm:$0xf]
      %v239 = vld [vmem:[%s1 + $0x14] sm:$0xf]
      %v240 = vld [vmem:[%s1 + $0x18] sm:$0xf]
      %v241 = vld [vmem:[%s1 + $0x1c] sm:$0xf]
      %v242 = vld [vmem:[%s1 + $0x20] sm:$0xf]
      %v243 = vld [vmem:[%s1 + $0x24] sm:$0xf]
      %v244 = vld [vmem:[%s1 + $0x28] sm:$0xf]
      %v245 = vld [vmem:[%s1 + $0x2c] sm:$0xf]
      %v246 = vld [vmem:[%s1 + $0x30] sm:$0xf]
      %v247 = vld [vmem:[%s1 + $0x34] sm:$0xf]
      %v248 = vld [vmem:[%s1 + $0x38] sm:$0xf]
      %v249 = vld [vmem:[%s1 + $0x3c] sm:$0xf]
      %v282 = vunpack.c.l.b16 %v202
      %v283 = vunpack.c.l.b16 %v203
      %v284 = vunpack.c.l.b16 %v204
      %v285 = vunpack.c.l.b16 %v205
      %v286 = vunpack.c.l.b16 %v206
      %v287 = vunpack.c.l.b16 %v207
      %v288 = vunpack.c.l.b16 %v208
      %v289 = vunpack.c.l.b16 %v209
      %v290 = vunpack.c.l.b16 %v210
      %v291 = vunpack.c.l.b16 %v211
      %v292 = vunpack.c.l.b16 %v212
      %v293 = vunpack.c.l.b16 %v213
      %v294 = vunpack.c.l.b16 %v214
      %v295 = vunpack.c.l.b16 %v215
      %v296 = vunpack.c.l.b16 %v216
      %v297 = vunpack.c.l.b16 %v217
      %v298 = vunpack.c.l.b16 %v218
      %v299 = vunpack.c.l.b16 %v219
      %v300 = vunpack.c.l.b16 %v220
      %v301 = vunpack.c.l.b16 %v221
      %v302 = vunpack.c.l.b16 %v222
      %v303 = vunpack.c.l.b16 %v223
      %v304 = vunpack.c.l.b16 %v224
      %v305 = vunpack.c.l.b16 %v225
      %v306 = vunpack.c.l.b16 %v226
      %v307 = vunpack.c.l.b16 %v227
      %v308 = vunpack.c.l.b16 %v228
      %v309 = vunpack.c.l.b16 %v229
      %v310 = vunpack.c.l.b16 %v230
      %v311 = vunpack.c.l.b16 %v231
      %v312 = vunpack.c.l.b16 %v232
      %v313 = vunpack.c.l.b16 %v233
      %v314 = vpack.c.b16 %v283, %v282
      %v315 = vpack.c.b16 %v285, %v284
      %v316 = vpack.c.b16 %v287, %v286
      %v317 = vpack.c.b16 %v289, %v288
      %v318 = vpack.c.b16 %v291, %v290
      %v319 = vpack.c.b16 %v293, %v292
      %v320 = vpack.c.b16 %v295, %v294
      %v321 = vpack.c.b16 %v297, %v296
      %v322 = vpack.c.b16 %v299, %v298
      %v323 = vpack.c.b16 %v301, %v300
      %v324 = vpack.c.b16 %v303, %v302
      %v325 = vpack.c.b16 %v305, %v304
      %v326 = vpack.c.b16 %v307, %v306
      %v327 = vpack.c.b16 %v309, %v308
      %v328 = vpack.c.b16 %v311, %v310
      %v329 = vpack.c.b16 %v313, %v312
      %v362 = vunpack.c.l.b16 %v234
      %v363 = vunpack.c.l.b16 %v235
      %v364 = vunpack.c.l.b16 %v236
      %v365 = vunpack.c.l.b16 %v237
      %v366 = vunpack.c.l.b16 %v238
      %v367 = vunpack.c.l.b16 %v239
      %v368 = vunpack.c.l.b16 %v240
      %v369 = vunpack.c.l.b16 %v241
      %v370 = vunpack.c.l.b16 %v242
      %v371 = vunpack.c.l.b16 %v243
      %v372 = vunpack.c.l.b16 %v244
      %v373 = vunpack.c.l.b16 %v245
      %v374 = vunpack.c.l.b16 %v246
      %v375 = vunpack.c.l.b16 %v247
      %v376 = vunpack.c.l.b16 %v248
      %v377 = vunpack.c.l.b16 %v249
      %v378 = vpack.c.b16 %v363, %v362
      %v379 = vpack.c.b16 %v365, %v364
      %v380 = vpack.c.b16 %v367, %v366
      %v381 = vpack.c.b16 %v369, %v368
      %v382 = vpack.c.b16 %v371, %v370
      %v383 = vpack.c.b16 %v373, %v372
      %v384 = vpack.c.b16 %v375, %v374
      %v385 = vpack.c.b16 %v377, %v376
      %394 = vmatprep.subr.bf16.mxu0 0
      %395 = vmatpush1.bf16.msra.mxu0 %v378
      %396 = vmatprep.subr.bf16.mxu0 0
      %397 = vmatpush1.bf16.msra.mxu0 %v379
      %398 = vmatprep.subr.bf16.mxu0 0
      %399 = vmatpush1.bf16.msra.mxu0 %v380
      %400 = vmatprep.subr.bf16.mxu0 0
      %401 = vmatpush1.bf16.msra.mxu0 %v381
      %402 = vmatprep.subr.bf16.mxu0 0
      %403 = vmatpush1.bf16.msra.mxu0 %v382
      %404 = vmatprep.subr.bf16.mxu0 0
      %405 = vmatpush1.bf16.msra.mxu0 %v383
      %406 = vmatprep.subr.bf16.mxu0 0
      %407 = vmatpush1.bf16.msra.mxu0 %v384
      %408 = vmatprep.subr.bf16.mxu0 0
      %409 = vmatpush1.bf16.msra.mxu0 %v385
      %410 = vmatprep.subr.bf16.mxu0 0
      %411 = vmatpush1.bf16.msra.mxu0 0
      %412 = vmatprep.subr.bf16.mxu0 0
      %413 = vmatpush1.bf16.msra.mxu0 0
      %414 = vmatprep.subr.bf16.mxu0 0
      %415 = vmatpush1.bf16.msra.mxu0 0
      %416 = vmatprep.subr.bf16.mxu0 0
      %417 = vmatpush1.bf16.msra.mxu0 0
      %418 = vmatprep.subr.bf16.mxu0 0
      %419 = vmatpush1.bf16.msra.mxu0 0
      %420 = vmatprep.subr.bf16.mxu0 0
      %421 = vmatpush1.bf16.msra.mxu0 0
      %422 = vmatprep.subr.bf16.mxu0 0
      %423 = vmatpush1.bf16.msra.mxu0 0
      %424 = vmatprep.subr.bf16.mxu0 0
      %425 = vmatpush1.bf16.msra.mxu0 0
      %426 = vmatprep.mubr.bf16.mxu0 0
      %427 = vmatmul.mubr.bf16.gmra.mrb[0].mxu0 %v314
      %v428 = vpop.f32.mrb[0].mxu0
      %v429 = vadd.f32 0.0, %v428
      %v430 = vpop.f32.mrb[0].mxu0
      %v431 = vpop.f32.mrb[0].mxu0
      %v432 = vadd.f32 0.0, %v431
      %v433 = vpop.f32.mrb[0].mxu0
      %434 = vmatprep.mubr.bf16.mxu0 0
      %435 = vmatmul.mubr.bf16.gmra.mrb[0].mxu0 %v315
      %v436 = vpop.f32.mrb[0].mxu0
      %v437 = vadd.f32 0.0, %v436
      %v438 = vpop.f32.mrb[0].mxu0
      %v439 = vpop.f32.mrb[0].mxu0
      %v440 = vadd.f32 0.0, %v439
      %v441 = vpop.f32.mrb[0].mxu0
      %442 = vmatprep.mubr.bf16.mxu0 0
      %443 = vmatmul.mubr.bf16.gmra.mrb[0].mxu0 %v316
      %v444 = vpop.f32.mrb[0].mxu0
      %v445 = vadd.f32 0.0, %v444
      %v446 = vpop.f32.mrb[0].mxu0
      %v447 = vpop.f32.mrb[0].mxu0
      %v448 = vadd.f32 0.0, %v447
      %v449 = vpop.f32.mrb[0].mxu0
      %450 = vmatprep.mubr.bf16.mxu0 0
      %451 = vmatmul.mubr.bf16.gmra.mrb[0].mxu0 %v317
      %v452 = vpop.f32.mrb[0].mxu0
      %v453 = vadd.f32 0.0, %v452
      %v454 = vpop.f32.mrb[0].mxu0
      %v455 = vpop.f32.mrb[0].mxu0
      %v456 = vadd.f32 0.0, %v455
      %v457 = vpop.f32.mrb[0].mxu0
      %458 = vmatprep.mubr.bf16.mxu0 0
      %459 = vmatmul.mubr.bf16.gmra.mrb[0].mxu0 %v318
      %v460 = vpop.f32.mrb[0].mxu0
      %v461 = vadd.f32 0.0, %v460
      %v462 = vpop.f32.mrb[0].mxu0
      %v463 = vpop.f32.mrb[0].mxu0
      %v464 = vadd.f32 0.0, %v463
      %v465 = vpop.f32.mrb[0].mxu0
      %466 = vmatprep.mubr.bf16.mxu0 0
      %467 = vmatmul.mubr.bf16.gmra.mrb[0].mxu0 %v319
      %v468 = vpop.f32.mrb[0].mxu0
      %v469 = vadd.f32 0.0, %v468
      %v470 = vpop.f32.mrb[0].mxu0
      %v471 = vpop.f32.mrb[0].mxu0
      %v472 = vadd.f32 0.0, %v471
      %v473 = vpop.f32.mrb[0].mxu0
      %474 = vmatprep.mubr.bf16.mxu0 0
      %475 = vmatmul.mubr.bf16.gmra.mrb[0].mxu0 %v320
      %v476 = vpop.f32.mrb[0].mxu0
      %v477 = vadd.f32 0.0, %v476
      %v478 = vpop.f32.mrb[0].mxu0
      %v479 = vpop.f32.mrb[0].mxu0
      %v480 = vadd.f32 0.0, %v479
      %v481 = vpop.f32.mrb[0].mxu0
      %482 = vmatprep.mubr.bf16.mxu0 0
      %483 = vmatmul.mubr.bf16.gmra.mrb[0].mxu0 %v321
      %v484 = vpop.f32.mrb[0].mxu0
      %v485 = vadd.f32 0.0, %v484
      %v486 = vpop.f32.mrb[0].mxu0
      %v487 = vpop.f32.mrb[0].mxu0
      %v488 = vadd.f32 0.0, %v487
      %v489 = vpop.f32.mrb[0].mxu0
      %490 = vmatprep.mubr.bf16.mxu0 0
      %491 = vmatmul.mubr.bf16.gmra.mrb[0].mxu0 %v322
      %v492 = vpop.f32.mrb[0].mxu0
      %v493 = vadd.f32 0.0, %v492
      %v494 = vpop.f32.mrb[0].mxu0
      %v495 = vpop.f32.mrb[0].mxu0
      %v496 = vadd.f32 0.0, %v495
      %v497 = vpop.f32.mrb[0].mxu0
      %498 = vmatprep.mubr.bf16.mxu0 0
      %499 = vmatmul.mubr.bf16.gmra.mrb[0].mxu0 %v323
      %v500 = vpop.f32.mrb[0].mxu0
      %v501 = vadd.f32 0.0, %v500
      %v502 = vpop.f32.mrb[0].mxu0
      %v503 = vpop.f32.mrb[0].mxu0
      %v504 = vadd.f32 0.0, %v503
      %v505 = vpop.f32.mrb[0].mxu0
      %506 = vmatprep.mubr.bf16.mxu0 0
      %507 = vmatmul.mubr.bf16.gmra.mrb[0].mxu0 %v324
      %v508 = vpop.f32.mrb[0].mxu0
      %v509 = vadd.f32 0.0, %v508
      %v510 = vpop.f32.mrb[0].mxu0
      %v511 = vpop.f32.mrb[0].mxu0
      %v512 = vadd.f32 0.0, %v511
      %v513 = vpop.f32.mrb[0].mxu0
      %514 = vmatprep.mubr.bf16.mxu0 0
      %515 = vmatmul.mubr.bf16.gmra.mrb[0].mxu0 %v325
      %v516 = vpop.f32.mrb[0].mxu0
      %v517 = vadd.f32 0.0, %v516
      %v518 = vpop.f32.mrb[0].mxu0
      %v519 = vpop.f32.mrb[0].mxu0
      %v520 = vadd.f32 0.0, %v519
      %v521 = vpop.f32.mrb[0].mxu0
      %522 = vmatprep.mubr.bf16.mxu0 0
      %523 = vmatmul.mubr.bf16.gmra.mrb[0].mxu0 %v326
      %v524 = vpop.f32.mrb[0].mxu0
      %v525 = vadd.f32 0.0, %v524
      %v526 = vpop.f32.mrb[0].mxu0
      %v527 = vpop.f32.mrb[0].mxu0
      %v528 = vadd.f32 0.0, %v527
      %v529 = vpop.f32.mrb[0].mxu0
      %530 = vmatprep.mubr.bf16.mxu0 0
      %531 = vmatmul.mubr.bf16.gmra.mrb[0].mxu0 %v327
      %v532 = vpop.f32.mrb[0].mxu0
      %v533 = vadd.f32 0.0, %v532
      %v534 = vpop.f32.mrb[0].mxu0
      %v535 = vpop.f32.mrb[0].mxu0
      %v536 = vadd.f32 0.0, %v535
      %v537 = vpop.f32.mrb[0].mxu0
      %538 = vmatprep.mubr.bf16.mxu0 0
      %539 = vmatmul.mubr.bf16.gmra.mrb[0].mxu0 %v328
      %v540 = vpop.f32.mrb[0].mxu0
      %v541 = vadd.f32 0.0, %v540
      %v542 = vpop.f32.mrb[0].mxu0
      %v543 = vpop.f32.mrb[0].mxu0
      %v544 = vadd.f32 0.0, %v543
      %v545 = vpop.f32.mrb[0].mxu0
      %546 = vmatprep.mubr.bf16.mxu0 0
      %547 = vmatmul.mubr.bf16.gmra.mrb[0].mxu0 %v329
      %v548 = vpop.f32.mrb[0].mxu0
      %v549 = vadd.f32 0.0, %v548
      %v550 = vpop.f32.mrb[0].mxu0
      %v551 = vpop.f32.mrb[0].mxu0
      %v552 = vadd.f32 0.0, %v551
      %v553 = vpop.f32.mrb[0].mxu0
      %554 = vdwg.mxu0
      %v555 = vld [vmem:[%s2] sm:$0x1]
      %v557 = vlaneseq
      %v558 = vshrl.u32 %v557, 7
      %v559 = vsub.s32 0, %v558
      %v560 = vrot.slane %v555, %v559
      %v562 = vmul.f32 %v429, %v560
      %v563 = vmul.f32 %v432, %v560
      %v564 = vmul.f32 %v437, %v560
      %v565 = vmul.f32 %v440, %v560
      %v566 = vmul.f32 %v445, %v560
      %v567 = vmul.f32 %v448, %v560
      %v568 = vmul.f32 %v453, %v560
      %v569 = vmul.f32 %v456, %v560
      %v570 = vmul.f32 %v461, %v560
      %v571 = vmul.f32 %v464, %v560
      %v572 = vmul.f32 %v469, %v560
      %v573 = vmul.f32 %v472, %v560
      %v574 = vmul.f32 %v477, %v560
      %v575 = vmul.f32 %v480, %v560
      %v576 = vmul.f32 %v485, %v560
      %v577 = vmul.f32 %v488, %v560
      %v578 = vmul.f32 %v493, %v560
      %v579 = vmul.f32 %v496, %v560
      %v580 = vmul.f32 %v501, %v560
      %v581 = vmul.f32 %v504, %v560
      %v582 = vmul.f32 %v509, %v560
      %v583 = vmul.f32 %v512, %v560
      %v584 = vmul.f32 %v517, %v560
      %v585 = vmul.f32 %v520, %v560
      %v586 = vmul.f32 %v525, %v560
      %v587 = vmul.f32 %v528, %v560
      %v588 = vmul.f32 %v533, %v560
      %v589 = vmul.f32 %v536, %v560
      %v590 = vmul.f32 %v541, %v560
      %v591 = vmul.f32 %v544, %v560
      %v592 = vmul.f32 %v549, %v560
      %v593 = vmul.f32 %v552, %v560
      %v594 = vld [vmem:[%s3] sm:$0x1]
      %v596 = vlaneseq
      %v597 = vshrl.u32 %v596, 7
      %v598 = vsub.s32 0, %v597
      %v599 = vrot.slane %v594, %v598
      %v601 = vadd.f32 %v562, %v599
      %v602 = vadd.f32 %v563, %v599
      %v603 = vadd.f32 %v564, %v599
      %v604 = vadd.f32 %v565, %v599
      %v605 = vadd.f32 %v566, %v599
      %v606 = vadd.f32 %v567, %v599
      %v607 = vadd.f32 %v568, %v599
      %v608 = vadd.f32 %v569, %v599
      %v609 = vadd.f32 %v570, %v599
      %v610 = vadd.f32 %v571, %v599
      %v611 = vadd.f32 %v572, %v599
      %v612 = vadd.f32 %v573, %v599
      %v613 = vadd.f32 %v574, %v599
      %v614 = vadd.f32 %v575, %v599
      %v615 = vadd.f32 %v576, %v599
      %v616 = vadd.f32 %v577, %v599
      %v617 = vadd.f32 %v578, %v599
      %v618 = vadd.f32 %v579, %v599
      %v619 = vadd.f32 %v580, %v599
      %v620 = vadd.f32 %v581, %v599
      %v621 = vadd.f32 %v582, %v599
      %v622 = vadd.f32 %v583, %v599
      %v623 = vadd.f32 %v584, %v599
      %v624 = vadd.f32 %v585, %v599
      %v625 = vadd.f32 %v586, %v599
      %v626 = vadd.f32 %v587, %v599
      %v627 = vadd.f32 %v588, %v599
      %v628 = vadd.f32 %v589, %v599
      %v629 = vadd.f32 %v590, %v599
      %v630 = vadd.f32 %v591, %v599
      %v631 = vadd.f32 %v592, %v599
      %v632 = vadd.f32 %v593, %v599
      %v633 = vmax.f32 %v601, 0.0
      %v634 = vmax.f32 %v602, 0.0
      %v635 = vmax.f32 %v603, 0.0
      %v636 = vmax.f32 %v604, 0.0
      %v637 = vmax.f32 %v605, 0.0
      %v638 = vmax.f32 %v606, 0.0
      %v639 = vmax.f32 %v607, 0.0
      %v640 = vmax.f32 %v608, 0.0
      %v641 = vmax.f32 %v609, 0.0
      %v642 = vmax.f32 %v610, 0.0
      %v643 = vmax.f32 %v611, 0.0
      %v644 = vmax.f32 %v612, 0.0
      %v645 = vmax.f32 %v613, 0.0
      %v646 = vmax.f32 %v614, 0.0
      %v647 = vmax.f32 %v615, 0.0
      %v648 = vmax.f32 %v616, 0.0
      %v649 = vmax.f32 %v617, 0.0
      %v650 = vmax.f32 %v618, 0.0
      %v651 = vmax.f32 %v619, 0.0
      %v652 = vmax.f32 %v620, 0.0
      %v653 = vmax.f32 %v621, 0.0
      %v654 = vmax.f32 %v622, 0.0
      %v655 = vmax.f32 %v623, 0.0
      %v656 = vmax.f32 %v624, 0.0
      %v657 = vmax.f32 %v625, 0.0
      %v658 = vmax.f32 %v626, 0.0
      %v659 = vmax.f32 %v627, 0.0
      %v660 = vmax.f32 %v628, 0.0
      %v661 = vmax.f32 %v629, 0.0
      %v662 = vmax.f32 %v630, 0.0
      %v663 = vmax.f32 %v631, 0.0
      %v664 = vmax.f32 %v632, 0.0
      %v665 = vpack.c.bf16 %v634, %v633
      %v666 = vpack.c.bf16 %v636, %v635
      %v667 = vpack.c.bf16 %v638, %v637
      %v668 = vpack.c.bf16 %v640, %v639
      %v669 = vpack.c.bf16 %v642, %v641
      %v670 = vpack.c.bf16 %v644, %v643
      %v671 = vpack.c.bf16 %v646, %v645
      %v672 = vpack.c.bf16 %v648, %v647
      %v673 = vpack.c.bf16 %v650, %v649
      %v674 = vpack.c.bf16 %v652, %v651
      %v675 = vpack.c.bf16 %v654, %v653
      %v676 = vpack.c.bf16 %v656, %v655
      %v677 = vpack.c.bf16 %v658, %v657
      %v678 = vpack.c.bf16 %v660, %v659
      %v679 = vpack.c.bf16 %v662, %v661
      %v680 = vpack.c.bf16 %v664, %v663
      %v697 = vunpack.c.l.b16 %v665
      %v698 = vunpack.c.h.b16 %v665
      %v699 = vunpack.c.l.b16 %v666
      %v700 = vunpack.c.h.b16 %v666
      %v701 = vunpack.c.l.b16 %v667
      %v702 = vunpack.c.h.b16 %v667
      %v703 = vunpack.c.l.b16 %v668
      %v704 = vunpack.c.h.b16 %v668
      %v705 = vunpack.c.l.b16 %v669
      %v706 = vunpack.c.h.b16 %v669
      %v707 = vunpack.c.l.b16 %v670
      %v708 = vunpack.c.h.b16 %v670
      %v709 = vunpack.c.l.b16 %v671
      %v710 = vunpack.c.h.b16 %v671
      %v711 = vunpack.c.l.b16 %v672
      %v712 = vunpack.c.h.b16 %v672
      %v713 = vunpack.c.l.b16 %v673
      %v714 = vunpack.c.h.b16 %v673
      %v715 = vunpack.c.l.b16 %v674
      %v716 = vunpack.c.h.b16 %v674
      %v717 = vunpack.c.l.b16 %v675
      %v718 = vunpack.c.h.b16 %v675
      %v719 = vunpack.c.l.b16 %v676
      %v720 = vunpack.c.h.b16 %v676
      %v721 = vunpack.c.l.b16 %v677
      %v722 = vunpack.c.h.b16 %v677
      %v723 = vunpack.c.l.b16 %v678
      %v724 = vunpack.c.h.b16 %v678
      %v725 = vunpack.c.l.b16 %v679
      %v726 = vunpack.c.h.b16 %v679
      %v727 = vunpack.c.l.b16 %v680
      %v728 = vunpack.c.h.b16 %v680
      %v729 = vpack.c.b16 %v697, %v697
      %v730 = vpack.c.b16 %v698, %v698
      %v731 = vpack.c.b16 %v699, %v699
      %v732 = vpack.c.b16 %v700, %v700
      %v733 = vpack.c.b16 %v701, %v701
      %v734 = vpack.c.b16 %v702, %v702
      %v735 = vpack.c.b16 %v703, %v703
      %v736 = vpack.c.b16 %v704, %v704
      %v737 = vpack.c.b16 %v705, %v705
      %v738 = vpack.c.b16 %v706, %v706
      %v739 = vpack.c.b16 %v707, %v707
      %v740 = vpack.c.b16 %v708, %v708
      %v741 = vpack.c.b16 %v709, %v709
      %v742 = vpack.c.b16 %v710, %v710
      %v743 = vpack.c.b16 %v711, %v711
      %v744 = vpack.c.b16 %v712, %v712
      %v745 = vpack.c.b16 %v713, %v713
      %v746 = vpack.c.b16 %v714, %v714
      %v747 = vpack.c.b16 %v715, %v715
      %v748 = vpack.c.b16 %v716, %v716
      %v749 = vpack.c.b16 %v717, %v717
      %v750 = vpack.c.b16 %v718, %v718
      %v751 = vpack.c.b16 %v719, %v719
      %v752 = vpack.c.b16 %v720, %v720
      %v753 = vpack.c.b16 %v721, %v721
      %v754 = vpack.c.b16 %v722, %v722
      %v755 = vpack.c.b16 %v723, %v723
      %v756 = vpack.c.b16 %v724, %v724
      %v757 = vpack.c.b16 %v725, %v725
      %v758 = vpack.c.b16 %v726, %v726
      %v759 = vpack.c.b16 %v727, %v727
      %v760 = vpack.c.b16 %v728, %v728
      %vm793 = vcmask 257024
      %794 = vst.msk [vmem:[%s199] sm:$0xf] %vm793, %v729
      %795 = vst.msk [vmem:[%s199 + $0x4] sm:$0xf] %vm793, %v730
      %796 = vst.msk [vmem:[%s199 + $0x8] sm:$0xf] %vm793, %v731
      %797 = vst.msk [vmem:[%s199 + $0xc] sm:$0xf] %vm793, %v732
      %798 = vst.msk [vmem:[%s199 + $0x10] sm:$0xf] %vm793, %v733
      %799 = vst.msk [vmem:[%s199 + $0x14] sm:$0xf] %vm793, %v734
      %800 = vst.msk [vmem:[%s199 + $0x18] sm:$0xf] %vm793, %v735
      %801 = vst.msk [vmem:[%s199 + $0x1c] sm:$0xf] %vm793, %v736
      %802 = vst.msk [vmem:[%s199 + $0x20] sm:$0xf] %vm793, %v737
      %803 = vst.msk [vmem:[%s199 + $0x24] sm:$0xf] %vm793, %v738
      %804 = vst.msk [vmem:[%s199 + $0x28] sm:$0xf] %vm793, %v739
      %805 = vst.msk [vmem:[%s199 + $0x2c] sm:$0xf] %vm793, %v740
      %806 = vst.msk [vmem:[%s199 + $0x30] sm:$0xf] %vm793, %v741
      %807 = vst.msk [vmem:[%s199 + $0x34] sm:$0xf] %vm793, %v742
      %808 = vst.msk [vmem:[%s199 + $0x38] sm:$0xf] %vm793, %v743
      %809 = vst.msk [vmem:[%s199 + $0x3c] sm:$0xf] %vm793, %v744
      %810 = vst.msk [vmem:[%s199 + $0x40] sm:$0xf] %vm793, %v745
      %811 = vst.msk [vmem:[%s199 + $0x44] sm:$0xf] %vm793, %v746
      %812 = vst.msk [vmem:[%s199 + $0x48] sm:$0xf] %vm793, %v747
      %813 = vst.msk [vmem:[%s199 + $0x4c] sm:$0xf] %vm793, %v748
      %814 = vst.msk [vmem:[%s199 + $0x50] sm:$0xf] %vm793, %v749
      %815 = vst.msk [vmem:[%s199 + $0x54] sm:$0xf] %vm793, %v750
      %816 = vst.msk [vmem:[%s199 + $0x58] sm:$0xf] %vm793, %v751
      %817 = vst.msk [vmem:[%s199 + $0x5c] sm:$0xf] %vm793, %v752
      %818 = vst.msk [vmem:[%s199 + $0x60] sm:$0xf] %vm793, %v753
      %819 = vst.msk [vmem:[%s199 + $0x64] sm:$0xf] %vm793, %v754
      %820 = vst.msk [vmem:[%s199 + $0x68] sm:$0xf] %vm793, %v755
      %821 = vst.msk [vmem:[%s199 + $0x6c] sm:$0xf] %vm793, %v756
      %822 = vst.msk [vmem:[%s199 + $0x70] sm:$0xf] %vm793, %v757
      %823 = vst.msk [vmem:[%s199 + $0x74] sm:$0xf] %vm793, %v758
      %824 = vst.msk [vmem:[%s199 + $0x78] sm:$0xf] %vm793, %v759
      %825 = vst.msk [vmem:[%s199 + $0x7c] sm:$0xf] %vm793, %v760
      %s826 = smul.u32 32, %s15
      %p827 = scmp.lt.s32.totalorder %s826, 63
      %s828 = scalar_select %p827, %s826, 63
      %s829 = smul.addr %s828, 4
      %s830 = scalar_lea.vmem %s4, %s829
      // Predicated region
      $region37: #{bottleneck_forward_pallas.3} parent=35 // pred_check
        %p831 = pneg %p122
      $region38: #{bottleneck_forward_pallas.3} parent=35 // pred_check_branch
        %833 = sbr.rel (%p831) target = $region40
      $region39: #{bottleneck_forward_pallas.3} parent=35 // pred_region
        %s834 = smul.u32 32, %s15
      $region40: #{bottleneck_forward_pallas.3} parent=35 // pred_fallthru
        _
    $region36: #{bottleneck_forward_pallas.3} parent=5 // pred_fallthru
      _
    %p835 = scmp.le.s32.totalorder 2, %s10
    // Predicated region
    $region41: #{bottleneck_forward_pallas.3} parent=5 // pred_check
      %p836 = pneg %p835
    $region42: #{bottleneck_forward_pallas.3} parent=5 // pred_check_branch
      %838 = sbr.rel (%p836) target = $region44
    $region43: #{bottleneck_forward_pallas.3} parent=5 // pred_region
      %s839 = ssub.s32 %s10, 2
      // Predicated region
      $region45: #{bottleneck_forward_pallas.3} parent=43 // pred_check
        %p840 = pneg %p128
      $region46: #{bottleneck_forward_pallas.3} parent=43 // pred_check_branch
        %842 = sbr.rel (%p840) target = $region48
      $region47: #{bottleneck_forward_pallas.3} parent=43 // pred_region
        %s843 = smul.u32 32, %s16
        %p844 = scmp.lt.s32.totalorder %s843, 63
        %s845 = scalar_select %p844, %s843, 63
        %s846 = smul.addr %s845, 4
        %s847 = scalar_lea.vmem %s4, %s846
      $region48: #{bottleneck_forward_pallas.3} parent=43 // pred_fallthru
        _
    $region44: #{bottleneck_forward_pallas.3} parent=5 // pred_fallthru
      _
  $region6: #{bottleneck_forward_pallas.3} parent=0 // loop_footer
    %s14 = sadd.s32 1, %s10
  $region7: #{bottleneck_forward_pallas.3} parent=0 // loop_footer_branch
    %9 = sbr.rel target = $region3
  $region8: #{bottleneck_forward_pallas.3} parent=0 // loop_exit
    _

// kernel: bottleneck_forward_pallas.4
$region0: #{bottleneck_forward_pallas.4}
  #allocation0 [shape = 'u32[]', space=smem, size = 0x4, offset = 0x4, fixed_abs, tag = 'smem constant byte address 0x4 - core index']
  #allocation1 [shape = 'u32[144,128]{1,0:T(1,128)}', space=vmem, size = 0x12000, scoped, tag = 'internal scratch']
  %s0 = inlined_call_operand.vmem [shape: bf16[2,1,18,16,96], index: 0, kind: input, shape index: {}]
  %s1 = inlined_call_operand.vmem [shape: bf16[3,96,32], index: 1, kind: input, shape index: {}]
  %s2 = inlined_call_operand.vmem [shape: f32[1,32], index: 2, kind: input, shape index: {}]
  %s3 = inlined_call_operand.vmem [shape: f32[1,32], index: 3, kind: input, shape index: {}]
  %s4 = inlined_call_operand.vmem [shape: bf16[2,256,32], index: 4, kind: output, shape index: {}]
  %s5 = sld [smem:[#allocation0]]
  $region49: #{bottleneck_forward_pallas.4} parent=0
    _
  %s7 = ssub.s32 1, %s5
  %s8 = scalar_select 0, %s7, %s5
  loop: start=0, step=1, limit=6
  $region2: #{bottleneck_forward_pallas.4} parent=0 // loop_pre_header
    _
  $region3: #{bottleneck_forward_pallas.4} parent=0 // loop_header
    %s10 = sphi 0, %s14
    %p11 = scmp.ge.s32.totalorder %s10, 6
    %s17 = sphi 0, %s29
    %s18 = sphi 0, %s25
    %s19 = sphi 0, %s17
    %s20 = sphi 0, %s18
    %s21 = sphi 0, %s19
    %s22 = sphi 0, %s20
    %s32 = sphi 0, %s34
    %s35 = sphi 0, %s32
    %s36 = sphi 0, %s35
    %s52 = sphi 0, %s36
    %s56 = sphi 0, %s56
    %s58 = sphi 0, %s56
    %s59 = sphi 0, %s58
    %s73 = sphi 0, %s59
    %s77 = sphi 0, %s77
    %s79 = sphi 0, %s77
    %s80 = sphi 0, %s79
    %s94 = sphi 0, %s80
    %s98 = sphi 0, %s98
    %s100 = sphi 0, %s98
    %s101 = sphi 0, %s100
    %s115 = sphi 0, %s101
    %s123 = sphi 0, %s125
    %s126 = sphi 0, %s123
    %s127 = sphi 0, %s126
    %s143 = sphi 0, %s127
  $region4: #{bottleneck_forward_pallas.4} parent=0 // loop_header_branch
    %13 = sbr.rel (%p11) target = $region8
  $region5: #{bottleneck_forward_pallas.4} parent=0 // loop_body
    %s15 = ssub.s32 %s10, 1
    %s16 = ssub.s32 %s10, 2
    %s23 = sadd.s32 1, %s18
    %p24 = scmp.ge.s32.totalorder %s23, 2
    %s25 = scalar_select %p24, 0, %s23
    %s26 = sadd.s32 1, %s17
    %s27 = scalar_select %p24, %s26, %s17
    %p28 = scmp.ge.s32.totalorder %s27, 2
    %s29 = scalar_select %p28, 0, %s27
    %s30 = ssub.s32 %s17, %s29
    %p31 = scmp.eq.s32.totalorder %s30, 0
    %s33 = sadd.s32 %s32, 1
    %s34 = scalar_select %p31, %s32, %s33
    %p37 = pneg %p31
    %p38 = scmp.eq.s32.totalorder %s10, 3
    %p39 = por %p37, %p38
    %p40 = scmp.ne.s32.totalorder %s32, %s35
    %p41 = scmp.eq.s32.totalorder %s10, 0
    %p42 = por %p40, %p41
    %p43 = scmp.ne.s32.totalorder %s32, %s35
    %p44 = scmp.eq.s32.totalorder %s15, 3
    %p45 = por %p43, %p44
    %p46 = scmp.ne.s32.totalorder %s35, %s36
    %p47 = scmp.eq.s32.totalorder %s15, 0
    %p48 = por %p46, %p47
    %p49 = scmp.ne.s32.totalorder %s35, %s36
    %p50 = scmp.eq.s32.totalorder %s16, 3
    %p51 = por %p49, %p50
    %p53 = scmp.ne.s32.totalorder %s36, %s52
    %p54 = scmp.eq.s32.totalorder %s16, 0
    %p55 = por %p53, %p54
    %s57 = sadd.s32 %s56, 1
    %p60 = scmp.eq.s32.totalorder %s10, 3
    %p61 = scmp.ne.s32.totalorder %s56, %s58
    %p62 = scmp.eq.s32.totalorder %s10, 0
    %p63 = por %p61, %p62
    %p64 = scmp.ne.s32.totalorder %s56, %s58
    %p65 = scmp.eq.s32.totalorder %s15, 3
    %p66 = por %p64, %p65
    %p67 = scmp.ne.s32.totalorder %s58, %s59
    %p68 = scmp.eq.s32.totalorder %s15, 0
    %p69 = por %p67, %p68
    %p70 = scmp.ne.s32.totalorder %s58, %s59
    %p71 = scmp.eq.s32.totalorder %s16, 3
    %p72 = por %p70, %p71
    %p74 = scmp.ne.s32.totalorder %s59, %s73
    %p75 = scmp.eq.s32.totalorder %s16, 0
    %p76 = por %p74, %p75
    %s78 = sadd.s32 %s77, 1
    %p81 = scmp.eq.s32.totalorder %s10, 3
    %p82 = scmp.ne.s32.totalorder %s77, %s79
    %p83 = scmp.eq.s32.totalorder %s10, 0
    %p84 = por %p82, %p83
    %p85 = scmp.ne.s32.totalorder %s77, %s79
    %p86 = scmp.eq.s32.totalorder %s15, 3
    %p87 = por %p85, %p86
    %p88 = scmp.ne.s32.totalorder %s79, %s80
    %p89 = scmp.eq.s32.totalorder %s15, 0
    %p90 = por %p88, %p89
    %p91 = scmp.ne.s32.totalorder %s79, %s80
    %p92 = scmp.eq.s32.totalorder %s16, 3
    %p93 = por %p91, %p92
    %p95 = scmp.ne.s32.totalorder %s80, %s94
    %p96 = scmp.eq.s32.totalorder %s16, 0
    %p97 = por %p95, %p96
    %s99 = sadd.s32 %s98, 1
    %p102 = scmp.eq.s32.totalorder %s10, 3
    %p103 = scmp.ne.s32.totalorder %s98, %s100
    %p104 = scmp.eq.s32.totalorder %s10, 0
    %p105 = por %p103, %p104
    %p106 = scmp.ne.s32.totalorder %s98, %s100
    %p107 = scmp.eq.s32.totalorder %s15, 3
    %p108 = por %p106, %p107
    %p109 = scmp.ne.s32.totalorder %s100, %s101
    %p110 = scmp.eq.s32.totalorder %s15, 0
    %p111 = por %p109, %p110
    %p112 = scmp.ne.s32.totalorder %s100, %s101
    %p113 = scmp.eq.s32.totalorder %s16, 3
    %p114 = por %p112, %p113
    %p116 = scmp.ne.s32.totalorder %s101, %s115
    %p117 = scmp.eq.s32.totalorder %s16, 0
    %p118 = por %p116, %p117
    %s119 = ssub.s32 %s17, %s29
    %s120 = ssub.s32 %s18, %s25
    %s121 = sor.u32 %s119, %s120
    %p122 = scmp.eq.s32.totalorder %s121, 0
    %s124 = sadd.s32 %s123, 1
    %s125 = scalar_select %p122, %s123, %s124
    %p128 = pneg %p122
    %p129 = scmp.eq.s32.totalorder %s10, 3
    %p130 = por %p128, %p129
    %p131 = scmp.ne.s32.totalorder %s123, %s126
    %p132 = scmp.eq.s32.totalorder %s10, 0
    %p133 = por %p131, %p132
    %p134 = scmp.ne.s32.totalorder %s123, %s126
    %p135 = scmp.eq.s32.totalorder %s15, 3
    %p136 = por %p134, %p135
    %p137 = scmp.ne.s32.totalorder %s126, %s127
    %p138 = scmp.eq.s32.totalorder %s15, 0
    %p139 = por %p137, %p138
    %p140 = scmp.ne.s32.totalorder %s126, %s127
    %p141 = scmp.eq.s32.totalorder %s16, 3
    %p142 = por %p140, %p141
    %p144 = scmp.ne.s32.totalorder %s127, %s143
    %p145 = scmp.eq.s32.totalorder %s16, 0
    %p146 = por %p144, %p145
    %p147 = scmp.le.s32.totalorder 1, %s10
    %p148 = scmp.lt.s32.totalorder %s10, 5
    %p149 = pnand %p147, %p148
    %p150 = pneg %p149
    // Predicated region
    $region9: #{bottleneck_forward_pallas.4} parent=5 // pred_check
      _
    $region10: #{bottleneck_forward_pallas.4} parent=5 // pred_check_branch
      %152 = sbr.rel (%p149) target = $region12
    $region11: #{bottleneck_forward_pallas.4} parent=5 // pred_region
      %s153 = ssub.s32 %s10, 1
      // Predicated region
      $region13: #{bottleneck_forward_pallas.4} parent=11 // pred_check
        %p154 = pneg %p69
      $region14: #{bottleneck_forward_pallas.4} parent=11 // pred_check_branch
        %156 = sbr.rel (%p154) target = $region16
      $region15: #{bottleneck_forward_pallas.4} parent=11 // pred_region
        _
      $region16: #{bottleneck_forward_pallas.4} parent=11 // pred_fallthru
        _
      // Predicated region
      $region17: #{bottleneck_forward_pallas.4} parent=11 // pred_check
        %p157 = pneg %p90
      $region18: #{bottleneck_forward_pallas.4} parent=11 // pred_check_branch
        %159 = sbr.rel (%p157) target = $region20
      $region19: #{bottleneck_forward_pallas.4} parent=11 // pred_region
        _
      $region20: #{bottleneck_forward_pallas.4} parent=11 // pred_fallthru
        _
      // Predicated region
      $region21: #{bottleneck_forward_pallas.4} parent=11 // pred_check
        %p160 = pneg %p111
      $region22: #{bottleneck_forward_pallas.4} parent=11 // pred_check_branch
        %162 = sbr.rel (%p160) target = $region24
      $region23: #{bottleneck_forward_pallas.4} parent=11 // pred_region
        _
      $region24: #{bottleneck_forward_pallas.4} parent=11 // pred_fallthru
        _
    $region12: #{bottleneck_forward_pallas.4} parent=5 // pred_fallthru
      _
    %p163 = scmp.lt.s32.totalorder %s10, 4
    // Predicated region
    $region25: #{bottleneck_forward_pallas.4} parent=5 // pred_check
      %p164 = pneg %p163
    $region26: #{bottleneck_forward_pallas.4} parent=5 // pred_check_branch
      %166 = sbr.rel (%p164) target = $region28
    $region27: #{bottleneck_forward_pallas.4} parent=5 // pred_region
      // Predicated region
      $region29: #{bottleneck_forward_pallas.4} parent=27 // pred_check
        %p167 = pneg %p42
      $region30: #{bottleneck_forward_pallas.4} parent=27 // pred_check_branch
        %169 = sbr.rel (%p167) target = $region32
      $region31: #{bottleneck_forward_pallas.4} parent=27 // pred_region
        %p170 = scmp.lt.s32.totalorder %s17, 1
        %s171 = scalar_select %p170, %s17, 1
        %s172 = smul.addr %s171, 36
        %s173 = smul.addr %s172, 4
        %s174 = scalar_lea.vmem %s0, %s173
      $region32: #{bottleneck_forward_pallas.4} parent=27 // pred_fallthru
        _
    $region28: #{bottleneck_forward_pallas.4} parent=5 // pred_fallthru
      _
    %p175 = scmp.le.s32.totalorder 1, %s10
    %p176 = scmp.lt.s32.totalorder %s10, 5
    %p177 = pnand %p175, %p176
    %p178 = pneg %p177
    // Predicated region
    $region33: #{bottleneck_forward_pallas.4} parent=5 // pred_check
      _
    $region34: #{bottleneck_forward_pallas.4} parent=5 // pred_check_branch
      %180 = sbr.rel (%p177) target = $region36
    $region35: #{bottleneck_forward_pallas.4} parent=5 // pred_region
      %s181 = ssub.s32 %s10, 1
      %p182 = scmp.lt.s32.totalorder %s19, 1
      %s183 = scalar_select %p182, %s19, 1
      %s184 = smul.addr %s183, 36
      %s185 = smul.addr %s184, 4
      %s186 = scalar_lea.vmem %s0, %s185
      %p187 = pneg %p48
      %p188 = pneg %p45
      %p189 = pneg %p69
      %p190 = pneg %p66
      %p191 = pneg %p90
      %p192 = pneg %p87
      %p193 = pneg %p111
      %p194 = pneg %p108
      %p195 = pneg %p139
      %p196 = pneg %p136
      %s197 = smul.u32 16, %s20
      %p198 = scmp.lt.s32.totalorder %s19, 1
      %s199 = scalar_select %p198, %s19, 1
      %p200 = scmp.lt.s32.totalorder %s197, 31
      %s201 = scalar_select %p200, %s197, 31
      %s202 = smul.addr %s199, 32
      %s203 = sadd.s32 %s201, %s202
      %s204 = smul.addr %s203, 4
      %s205 = scalar_lea.vmem %s4, %s204
      %p206 = scmp.lt.s32.totalorder %s19, 1
      %s207 = scalar_select %p206, %s19, 1
      %s208 = smul.addr %s207, 36
      %s209 = smul.addr %s208, 4
      %s210 = scalar_lea.vmem %s0, %s209
      %s211 = smul.u32 16, %s20
      %p212 = scmp.lt.s32.totalorder %s19, 1
      %s213 = scalar_select %p212, %s19, 1
      %p214 = scmp.lt.s32.totalorder %s211, 31
      %s215 = scalar_select %p214, %s211, 31
      %s216 = smul.addr %s213, 32
      %s217 = sadd.s32 %s215, %s216
      %s218 = smul.addr %s217, 4
      %s219 = scalar_lea.vmem %s4, %s218
      %s220 = smul.u32 16, %s20
      %s222 = smul.u32 %s20, 8
      %s223 = smul.u32 %s222, 2
      %s224 = smul.addr %s223, 4
      %s225 = scalar_lea.vmem %s210, %s224
      %v226 = vld [vmem:[%s225] sm:$0xf]
      %v227 = vld [vmem:[%s225 + $0x4] sm:$0xf]
      %v228 = vld [vmem:[%s225 + $0x8] sm:$0xf]
      %v229 = vld [vmem:[%s225 + $0xc] sm:$0xf]
      %v230 = vld [vmem:[%s225 + $0x10] sm:$0xf]
      %v231 = vld [vmem:[%s225 + $0x14] sm:$0xf]
      %v232 = vld [vmem:[%s225 + $0x18] sm:$0xf]
      %v233 = vld [vmem:[%s225 + $0x1c] sm:$0xf]
      %v234 = vld [vmem:[%s225 + $0x20] sm:$0xf]
      %v235 = vld [vmem:[%s225 + $0x24] sm:$0xf]
      %v236 = vld [vmem:[%s225 + $0x28] sm:$0xf]
      %v237 = vld [vmem:[%s225 + $0x2c] sm:$0xf]
      %v238 = vld [vmem:[%s225 + $0x30] sm:$0xf]
      %v239 = vld [vmem:[%s225 + $0x34] sm:$0xf]
      %v240 = vld [vmem:[%s225 + $0x38] sm:$0xf]
      %v241 = vld [vmem:[%s225 + $0x3c] sm:$0xf]
      %v242 = vld [vmem:[%s1] sm:$0xf]
      %v243 = vld [vmem:[%s1 + $0x4] sm:$0xf]
      %v244 = vld [vmem:[%s1 + $0x8] sm:$0xf]
      %v245 = vld [vmem:[%s1 + $0xc] sm:$0xf]
      %v246 = vld [vmem:[%s1 + $0x10] sm:$0xf]
      %v247 = vld [vmem:[%s1 + $0x14] sm:$0xf]
      %v248 = vld [vmem:[%s1 + $0x18] sm:$0xf]
      %v249 = vld [vmem:[%s1 + $0x1c] sm:$0xf]
      %v250 = vld [vmem:[%s1 + $0x20] sm:$0xf]
      %v251 = vld [vmem:[%s1 + $0x24] sm:$0xf]
      %v252 = vld [vmem:[%s1 + $0x28] sm:$0xf]
      %v253 = vld [vmem:[%s1 + $0x2c] sm:$0xf]
      %s254 = sadd.s32 %s222, 1
      %s255 = smul.u32 %s254, 2
      %s256 = smul.addr %s255, 4
      %s257 = scalar_lea.vmem %s210, %s256
      %v258 = vld [vmem:[%s257] sm:$0xf]
      %v259 = vld [vmem:[%s257 + $0x4] sm:$0xf]
      %v260 = vld [vmem:[%s257 + $0x8] sm:$0xf]
      %v261 = vld [vmem:[%s257 + $0xc] sm:$0xf]
      %v262 = vld [vmem:[%s257 + $0x10] sm:$0xf]
      %v263 = vld [vmem:[%s257 + $0x14] sm:$0xf]
      %v264 = vld [vmem:[%s257 + $0x18] sm:$0xf]
      %v265 = vld [vmem:[%s257 + $0x1c] sm:$0xf]
      %v266 = vld [vmem:[%s257 + $0x20] sm:$0xf]
      %v267 = vld [vmem:[%s257 + $0x24] sm:$0xf]
      %v268 = vld [vmem:[%s257 + $0x28] sm:$0xf]
      %v269 = vld [vmem:[%s257 + $0x2c] sm:$0xf]
      %v270 = vld [vmem:[%s257 + $0x30] sm:$0xf]
      %v271 = vld [vmem:[%s257 + $0x34] sm:$0xf]
      %v272 = vld [vmem:[%s257 + $0x38] sm:$0xf]
      %v273 = vld [vmem:[%s257 + $0x3c] sm:$0xf]
      %s274 = scalar_lea.vmem %s1, 48
      %v275 = vld [vmem:[%s274] sm:$0xf]
      %v276 = vld [vmem:[%s274 + $0x4] sm:$0xf]
      %v277 = vld [vmem:[%s274 + $0x8] sm:$0xf]
      %v278 = vld [vmem:[%s274 + $0xc] sm:$0xf]
      %v279 = vld [vmem:[%s274 + $0x10] sm:$0xf]
      %v280 = vld [vmem:[%s274 + $0x14] sm:$0xf]
      %v281 = vld [vmem:[%s274 + $0x18] sm:$0xf]
      %v282 = vld [vmem:[%s274 + $0x1c] sm:$0xf]
      %v283 = vld [vmem:[%s274 + $0x20] sm:$0xf]
      %v284 = vld [vmem:[%s274 + $0x24] sm:$0xf]
      %v285 = vld [vmem:[%s274 + $0x28] sm:$0xf]
      %v286 = vld [vmem:[%s274 + $0x2c] sm:$0xf]
      %v303 = vunpack.c.l.b16 %v258
      %v304 = vunpack.c.l.b16 %v259
      %v305 = vunpack.c.l.b16 %v260
      %v306 = vunpack.c.l.b16 %v261
      %v307 = vunpack.c.l.b16 %v262
      %v308 = vunpack.c.l.b16 %v263
      %v309 = vunpack.c.l.b16 %v264
      %v310 = vunpack.c.l.b16 %v265
      %v311 = vunpack.c.l.b16 %v266
      %v312 = vunpack.c.l.b16 %v267
      %v313 = vunpack.c.l.b16 %v268
      %v314 = vunpack.c.l.b16 %v269
      %v315 = vunpack.c.l.b16 %v270
      %v316 = vunpack.c.l.b16 %v271
      %v317 = vunpack.c.l.b16 %v272
      %v318 = vunpack.c.l.b16 %v273
      %v319 = vpack.c.b16 %v304, %v303
      %v320 = vpack.c.b16 %v306, %v305
      %v321 = vpack.c.b16 %v308, %v307
      %v322 = vpack.c.b16 %v310, %v309
      %v323 = vpack.c.b16 %v312, %v311
      %v324 = vpack.c.b16 %v314, %v313
      %v325 = vpack.c.b16 %v316, %v315
      %v326 = vpack.c.b16 %v318, %v317
      %v339 = vunpack.c.l.b16 %v275
      %v340 = vunpack.c.l.b16 %v276
      %v341 = vunpack.c.l.b16 %v277
      %v342 = vunpack.c.l.b16 %v278
      %v343 = vunpack.c.l.b16 %v279
      %v344 = vunpack.c.l.b16 %v280
      %v345 = vunpack.c.l.b16 %v281
      %v346 = vunpack.c.l.b16 %v282
      %v347 = vunpack.c.l.b16 %v283
      %v348 = vunpack.c.l.b16 %v284
      %v349 = vunpack.c.l.b16 %v285
      %v350 = vunpack.c.l.b16 %v286
      %v351 = vpack.c.b16 %v340, %v339
      %v352 = vpack.c.b16 %v342, %v341
      %v353 = vpack.c.b16 %v344, %v343
      %v354 = vpack.c.b16 %v346, %v345
      %v355 = vpack.c.b16 %v348, %v347
      %v356 = vpack.c.b16 %v350, %v349
      %vm363 = vcmask 785408
      %v365 = vsel %vm363, %v319, 0
      %v368 = vsel %vm363, %v320, 0
      %v371 = vsel %vm363, %v321, 0
      %v374 = vsel %vm363, %v322, 0
      %v377 = vsel %vm363, %v323, 0
      %v380 = vsel %vm363, %v324, 0
      %v383 = vsel %vm363, %v325, 0
      %v386 = vsel %vm363, %v326, 0
      %388 = vmatprep.subr.bf16.mxu0 0
      %389 = vmatpush1.bf16.msra.mxu0 %v351
      %390 = vmatprep.subr.bf16.mxu0 0
      %391 = vmatpush1.bf16.msra.mxu0 %v352
      %392 = vmatprep.subr.bf16.mxu0 0
      %393 = vmatpush1.bf16.msra.mxu0 %v353
      %394 = vmatprep.subr.bf16.mxu0 0
      %395 = vmatpush1.bf16.msra.mxu0 %v354
      %396 = vmatprep.subr.bf16.mxu0 0
      %397 = vmatpush1.bf16.msra.mxu0 %v355
      %398 = vmatprep.subr.bf16.mxu0 0
      %399 = vmatpush1.bf16.msra.mxu0 %v356
      %400 = vmatprep.subr.bf16.mxu0 0
      %401 = vmatpush1.bf16.msra.mxu0 0
      %402 = vmatprep.subr.bf16.mxu0 0
      %403 = vmatpush1.bf16.msra.mxu0 0
      %404 = vmatprep.subr.bf16.mxu0 0
      %405 = vmatpush1.bf16.msra.mxu0 0
      %406 = vmatprep.subr.bf16.mxu0 0
      %407 = vmatpush1.bf16.msra.mxu0 0
      %408 = vmatprep.subr.bf16.mxu0 0
      %409 = vmatpush1.bf16.msra.mxu0 0
      %410 = vmatprep.subr.bf16.mxu0 0
      %411 = vmatpush1.bf16.msra.mxu0 0
      %412 = vmatprep.subr.bf16.mxu0 0
      %413 = vmatpush1.bf16.msra.mxu0 0
      %414 = vmatprep.subr.bf16.mxu0 0
      %415 = vmatpush1.bf16.msra.mxu0 0
      %416 = vmatprep.subr.bf16.mxu0 0
      %417 = vmatpush1.bf16.msra.mxu0 0
      %418 = vmatprep.subr.bf16.mxu0 0
      %419 = vmatpush1.bf16.msra.mxu0 0
      %420 = vmatprep.mubr.bf16.mxu0 0
      %421 = vmatmul.mubr.bf16.gmra.mrb[0].mxu0 %v365
      %v422 = vpop.f32.mrb[0].mxu0
      %v423 = vadd.f32 0.0, %v422
      %v424 = vpop.f32.mrb[0].mxu0
      %v425 = vpop.f32.mrb[0].mxu0
      %v426 = vadd.f32 0.0, %v425
      %v427 = vpop.f32.mrb[0].mxu0
      %428 = vmatprep.mubr.bf16.mxu0 0
      %429 = vmatmul.mubr.bf16.gmra.mrb[0].mxu0 %v368
      %v430 = vpop.f32.mrb[0].mxu0
      %v431 = vadd.f32 0.0, %v430
      %v432 = vpop.f32.mrb[0].mxu0
      %v433 = vpop.f32.mrb[0].mxu0
      %v434 = vadd.f32 0.0, %v433
      %v435 = vpop.f32.mrb[0].mxu0
      %436 = vmatprep.mubr.bf16.mxu0 0
      %437 = vmatmul.mubr.bf16.gmra.mrb[0].mxu0 %v371
      %v438 = vpop.f32.mrb[0].mxu0
      %v439 = vadd.f32 0.0, %v438
      %v440 = vpop.f32.mrb[0].mxu0
      %v441 = vpop.f32.mrb[0].mxu0
      %v442 = vadd.f32 0.0, %v441
      %v443 = vpop.f32.mrb[0].mxu0
      %444 = vmatprep.mubr.bf16.mxu0 0
      %445 = vmatmul.mubr.bf16.gmra.mrb[0].mxu0 %v374
      %v446 = vpop.f32.mrb[0].mxu0
      %v447 = vadd.f32 0.0, %v446
      %v448 = vpop.f32.mrb[0].mxu0
      %v449 = vpop.f32.mrb[0].mxu0
      %v450 = vadd.f32 0.0, %v449
      %v451 = vpop.f32.mrb[0].mxu0
      %452 = vmatprep.mubr.bf16.mxu0 0
      %453 = vmatmul.mubr.bf16.gmra.mrb[0].mxu0 %v377
      %v454 = vpop.f32.mrb[0].mxu0
      %v455 = vadd.f32 0.0, %v454
      %v456 = vpop.f32.mrb[0].mxu0
      %v457 = vpop.f32.mrb[0].mxu0
      %v458 = vadd.f32 0.0, %v457
      %v459 = vpop.f32.mrb[0].mxu0
      %460 = vmatprep.mubr.bf16.mxu0 0
      %461 = vmatmul.mubr.bf16.gmra.mrb[0].mxu0 %v380
      %v462 = vpop.f32.mrb[0].mxu0
      %v463 = vadd.f32 0.0, %v462
      %v464 = vpop.f32.mrb[0].mxu0
      %v465 = vpop.f32.mrb[0].mxu0
      %v466 = vadd.f32 0.0, %v465
      %v467 = vpop.f32.mrb[0].mxu0
      %468 = vmatprep.mubr.bf16.mxu0 0
      %469 = vmatmul.mubr.bf16.gmra.mrb[0].mxu0 %v383
      %v470 = vpop.f32.mrb[0].mxu0
      %v471 = vadd.f32 0.0, %v470
      %v472 = vpop.f32.mrb[0].mxu0
      %v473 = vpop.f32.mrb[0].mxu0
      %v474 = vadd.f32 0.0, %v473
      %v475 = vpop.f32.mrb[0].mxu0
      %476 = vmatprep.mubr.bf16.mxu0 0
      %477 = vmatmul.mubr.bf16.gmra.mrb[0].mxu0 %v386
      %v478 = vpop.f32.mrb[0].mxu0
      %v479 = vadd.f32 0.0, %v478
      %v480 = vpop.f32.mrb[0].mxu0
      %v481 = vpop.f32.mrb[0].mxu0
      %v482 = vadd.f32 0.0, %v481
      %v483 = vpop.f32.mrb[0].mxu0
      %484 = vdwg.mxu0
      %v501 = vunpack.c.l.b16 %v226
      %v502 = vunpack.c.l.b16 %v227
      %v503 = vunpack.c.l.b16 %v228
      %v504 = vunpack.c.l.b16 %v229
      %v505 = vunpack.c.l.b16 %v230
      %v506 = vunpack.c.l.b16 %v231
      %v507 = vunpack.c.l.b16 %v232
      %v508 = vunpack.c.l.b16 %v233
      %v509 = vunpack.c.l.b16 %v234
      %v510 = vunpack.c.l.b16 %v235
      %v511 = vunpack.c.l.b16 %v236
      %v512 = vunpack.c.l.b16 %v237
      %v513 = vunpack.c.l.b16 %v238
      %v514 = vunpack.c.l.b16 %v239
      %v515 = vunpack.c.l.b16 %v240
      %v516 = vunpack.c.l.b16 %v241
      %v517 = vpack.c.b16 %v502, %v501
      %v518 = vpack.c.b16 %v504, %v503
      %v519 = vpack.c.b16 %v506, %v505
      %v520 = vpack.c.b16 %v508, %v507
      %v521 = vpack.c.b16 %v510, %v509
      %v522 = vpack.c.b16 %v512, %v511
      %v523 = vpack.c.b16 %v514, %v513
      %v524 = vpack.c.b16 %v516, %v515
      %v537 = vunpack.c.l.b16 %v242
      %v538 = vunpack.c.l.b16 %v243
      %v539 = vunpack.c.l.b16 %v244
      %v540 = vunpack.c.l.b16 %v245
      %v541 = vunpack.c.l.b16 %v246
      %v542 = vunpack.c.l.b16 %v247
      %v543 = vunpack.c.l.b16 %v248
      %v544 = vunpack.c.l.b16 %v249
      %v545 = vunpack.c.l.b16 %v250
      %v546 = vunpack.c.l.b16 %v251
      %v547 = vunpack.c.l.b16 %v252
      %v548 = vunpack.c.l.b16 %v253
      %v549 = vpack.c.b16 %v538, %v537
      %v550 = vpack.c.b16 %v540, %v539
      %v551 = vpack.c.b16 %v542, %v541
      %v552 = vpack.c.b16 %v544, %v543
      %v553 = vpack.c.b16 %v546, %v545
      %v554 = vpack.c.b16 %v548, %v547
      %v562 = vsel %vm363, %v517, 0
      %v565 = vsel %vm363, %v518, 0
      %v568 = vsel %vm363, %v519, 0
      %v571 = vsel %vm363, %v520, 0
      %v574 = vsel %vm363, %v521, 0
      %v577 = vsel %vm363, %v522, 0
      %v580 = vsel %vm363, %v523, 0
      %v583 = vsel %vm363, %v524, 0
      %585 = vmatprep.subr.bf16.mxu0 0
      %586 = vmatpush1.bf16.msra.mxu0 %v549
      %587 = vmatprep.subr.bf16.mxu0 0
      %588 = vmatpush1.bf16.msra.mxu0 %v550
      %589 = vmatprep.subr.bf16.mxu0 0
      %590 = vmatpush1.bf16.msra.mxu0 %v551
      %591 = vmatprep.subr.bf16.mxu0 0
      %592 = vmatpush1.bf16.msra.mxu0 %v552
      %593 = vmatprep.subr.bf16.mxu0 0
      %594 = vmatpush1.bf16.msra.mxu0 %v553
      %595 = vmatprep.subr.bf16.mxu0 0
      %596 = vmatpush1.bf16.msra.mxu0 %v554
      %597 = vmatprep.subr.bf16.mxu0 0
      %598 = vmatpush1.bf16.msra.mxu0 0
      %599 = vmatprep.subr.bf16.mxu0 0
      %600 = vmatpush1.bf16.msra.mxu0 0
      %601 = vmatprep.subr.bf16.mxu0 0
      %602 = vmatpush1.bf16.msra.mxu0 0
      %603 = vmatprep.subr.bf16.mxu0 0
      %604 = vmatpush1.bf16.msra.mxu0 0
      %605 = vmatprep.subr.bf16.mxu0 0
      %606 = vmatpush1.bf16.msra.mxu0 0
      %607 = vmatprep.subr.bf16.mxu0 0
      %608 = vmatpush1.bf16.msra.mxu0 0
      %609 = vmatprep.subr.bf16.mxu0 0
      %610 = vmatpush1.bf16.msra.mxu0 0
      %611 = vmatprep.subr.bf16.mxu0 0
      %612 = vmatpush1.bf16.msra.mxu0 0
      %613 = vmatprep.subr.bf16.mxu0 0
      %614 = vmatpush1.bf16.msra.mxu0 0
      %615 = vmatprep.subr.bf16.mxu0 0
      %616 = vmatpush1.bf16.msra.mxu0 0
      %617 = vmatprep.mubr.bf16.mxu0 0
      %618 = vmatmul.mubr.bf16.gmra.mrb[0].mxu0 %v562
      %v619 = vpop.f32.mrb[0].mxu0
      %v620 = vadd.f32 %v423, %v619
      %v621 = vpop.f32.mrb[0].mxu0
      %v622 = vpop.f32.mrb[0].mxu0
      %v623 = vadd.f32 %v426, %v622
      %v624 = vpop.f32.mrb[0].mxu0
      %625 = vmatprep.mubr.bf16.mxu0 0
      %626 = vmatmul.mubr.bf16.gmra.mrb[0].mxu0 %v565
      %v627 = vpop.f32.mrb[0].mxu0
      %v628 = vadd.f32 %v431, %v627
      %v629 = vpop.f32.mrb[0].mxu0
      %v630 = vpop.f32.mrb[0].mxu0
      %v631 = vadd.f32 %v434, %v630
      %v632 = vpop.f32.mrb[0].mxu0
      %633 = vmatprep.mubr.bf16.mxu0 0
      %634 = vmatmul.mubr.bf16.gmra.mrb[0].mxu0 %v568
      %v635 = vpop.f32.mrb[0].mxu0
      %v636 = vadd.f32 %v439, %v635
      %v637 = vpop.f32.mrb[0].mxu0
      %v638 = vpop.f32.mrb[0].mxu0
      %v639 = vadd.f32 %v442, %v638
      %v640 = vpop.f32.mrb[0].mxu0
      %641 = vmatprep.mubr.bf16.mxu0 0
      %642 = vmatmul.mubr.bf16.gmra.mrb[0].mxu0 %v571
      %v643 = vpop.f32.mrb[0].mxu0
      %v644 = vadd.f32 %v447, %v643
      %v645 = vpop.f32.mrb[0].mxu0
      %v646 = vpop.f32.mrb[0].mxu0
      %v647 = vadd.f32 %v450, %v646
      %v648 = vpop.f32.mrb[0].mxu0
      %649 = vmatprep.mubr.bf16.mxu0 0
      %650 = vmatmul.mubr.bf16.gmra.mrb[0].mxu0 %v574
      %v651 = vpop.f32.mrb[0].mxu0
      %v652 = vadd.f32 %v455, %v651
      %v653 = vpop.f32.mrb[0].mxu0
      %v654 = vpop.f32.mrb[0].mxu0
      %v655 = vadd.f32 %v458, %v654
      %v656 = vpop.f32.mrb[0].mxu0
      %657 = vmatprep.mubr.bf16.mxu0 0
      %658 = vmatmul.mubr.bf16.gmra.mrb[0].mxu0 %v577
      %v659 = vpop.f32.mrb[0].mxu0
      %v660 = vadd.f32 %v463, %v659
      %v661 = vpop.f32.mrb[0].mxu0
      %v662 = vpop.f32.mrb[0].mxu0
      %v663 = vadd.f32 %v466, %v662
      %v664 = vpop.f32.mrb[0].mxu0
      %665 = vmatprep.mubr.bf16.mxu0 0
      %666 = vmatmul.mubr.bf16.gmra.mrb[0].mxu0 %v580
      %v667 = vpop.f32.mrb[0].mxu0
      %v668 = vadd.f32 %v471, %v667
      %v669 = vpop.f32.mrb[0].mxu0
      %v670 = vpop.f32.mrb[0].mxu0
      %v671 = vadd.f32 %v474, %v670
      %v672 = vpop.f32.mrb[0].mxu0
      %673 = vmatprep.mubr.bf16.mxu0 0
      %674 = vmatmul.mubr.bf16.gmra.mrb[0].mxu0 %v583
      %v675 = vpop.f32.mrb[0].mxu0
      %v676 = vadd.f32 %v479, %v675
      %v677 = vpop.f32.mrb[0].mxu0
      %v678 = vpop.f32.mrb[0].mxu0
      %v679 = vadd.f32 %v482, %v678
      %v680 = vpop.f32.mrb[0].mxu0
      %681 = vdwg.mxu0
      %s682 = sadd.s32 %s222, 2
      %s683 = smul.u32 %s682, 2
      %s684 = smul.addr %s683, 4
      %s685 = scalar_lea.vmem %s210, %s684
      %v686 = vld [vmem:[%s685] sm:$0xf]
      %v687 = vld [vmem:[%s685 + $0x4] sm:$0xf]
      %v688 = vld [vmem:[%s685 + $0x8] sm:$0xf]
      %v689 = vld [vmem:[%s685 + $0xc] sm:$0xf]
      %v690 = vld [vmem:[%s685 + $0x10] sm:$0xf]
      %v691 = vld [vmem:[%s685 + $0x14] sm:$0xf]
      %v692 = vld [vmem:[%s685 + $0x18] sm:$0xf]
      %v693 = vld [vmem:[%s685 + $0x1c] sm:$0xf]
      %v694 = vld [vmem:[%s685 + $0x20] sm:$0xf]
      %v695 = vld [vmem:[%s685 + $0x24] sm:$0xf]
      %v696 = vld [vmem:[%s685 + $0x28] sm:$0xf]
      %v697 = vld [vmem:[%s685 + $0x2c] sm:$0xf]
      %v698 = vld [vmem:[%s685 + $0x30] sm:$0xf]
      %v699 = vld [vmem:[%s685 + $0x34] sm:$0xf]
      %v700 = vld [vmem:[%s685 + $0x38] sm:$0xf]
      %v701 = vld [vmem:[%s685 + $0x3c] sm:$0xf]
      %s702 = scalar_lea.vmem %s1, 96
      %v703 = vld [vmem:[%s702] sm:$0xf]
      %v704 = vld [vmem:[%s702 + $0x4] sm:$0xf]
      %v705 = vld [vmem:[%s702 + $0x8] sm:$0xf]
      %v706 = vld [vmem:[%s702 + $0xc] sm:$0xf]
      %v707 = vld [vmem:[%s702 + $0x10] sm:$0xf]
      %v708 = vld [vmem:[%s702 + $0x14] sm:$0xf]
      %v709 = vld [vmem:[%s702 + $0x18] sm:$0xf]
      %v710 = vld [vmem:[%s702 + $0x1c] sm:$0xf]
      %v711 = vld [vmem:[%s702 + $0x20] sm:$0xf]
      %v712 = vld [vmem:[%s702 + $0x24] sm:$0xf]
      %v713 = vld [vmem:[%s702 + $0x28] sm:$0xf]
      %v714 = vld [vmem:[%s702 + $0x2c] sm:$0xf]
      %v731 = vunpack.c.l.b16 %v686
      %v732 = vunpack.c.l.b16 %v687
      %v733 = vunpack.c.l.b16 %v688
      %v734 = vunpack.c.l.b16 %v689
      %v735 = vunpack.c.l.b16 %v690
      %v736 = vunpack.c.l.b16 %v691
      %v737 = vunpack.c.l.b16 %v692
      %v738 = vunpack.c.l.b16 %v693
      %v739 = vunpack.c.l.b16 %v694
      %v740 = vunpack.c.l.b16 %v695
      %v741 = vunpack.c.l.b16 %v696
      %v742 = vunpack.c.l.b16 %v697
      %v743 = vunpack.c.l.b16 %v698
      %v744 = vunpack.c.l.b16 %v699
      %v745 = vunpack.c.l.b16 %v700
      %v746 = vunpack.c.l.b16 %v701
      %v747 = vpack.c.b16 %v732, %v731
      %v748 = vpack.c.b16 %v734, %v733
      %v749 = vpack.c.b16 %v736, %v735
      %v750 = vpack.c.b16 %v738, %v737
      %v751 = vpack.c.b16 %v740, %v739
      %v752 = vpack.c.b16 %v742, %v741
      %v753 = vpack.c.b16 %v744, %v743
      %v754 = vpack.c.b16 %v746, %v745
      %v767 = vunpack.c.l.b16 %v703
      %v768 = vunpack.c.l.b16 %v704
      %v769 = vunpack.c.l.b16 %v705
      %v770 = vunpack.c.l.b16 %v706
      %v771 = vunpack.c.l.b16 %v707
      %v772 = vunpack.c.l.b16 %v708
      %v773 = vunpack.c.l.b16 %v709
      %v774 = vunpack.c.l.b16 %v710
      %v775 = vunpack.c.l.b16 %v711
      %v776 = vunpack.c.l.b16 %v712
      %v777 = vunpack.c.l.b16 %v713
      %v778 = vunpack.c.l.b16 %v714
      %v779 = vpack.c.b16 %v768, %v767
      %v780 = vpack.c.b16 %v770, %v769
      %v781 = vpack.c.b16 %v772, %v771
      %v782 = vpack.c.b16 %v774, %v773
      %v783 = vpack.c.b16 %v776, %v775
      %v784 = vpack.c.b16 %v778, %v777
      %v792 = vsel %vm363, %v747, 0
      %v795 = vsel %vm363, %v748, 0
      %v798 = vsel %vm363, %v749, 0
      %v801 = vsel %vm363, %v750, 0
      %v804 = vsel %vm363, %v751, 0
      %v807 = vsel %vm363, %v752, 0
      %v810 = vsel %vm363, %v753, 0
      %v813 = vsel %vm363, %v754, 0
      %815 = vmatprep.subr.bf16.mxu0 0
      %816 = vmatpush1.bf16.msra.mxu0 %v779
      %817 = vmatprep.subr.bf16.mxu0 0
      %818 = vmatpush1.bf16.msra.mxu0 %v780
      %819 = vmatprep.subr.bf16.mxu0 0
      %820 = vmatpush1.bf16.msra.mxu0 %v781
      %821 = vmatprep.subr.bf16.mxu0 0
      %822 = vmatpush1.bf16.msra.mxu0 %v782
      %823 = vmatprep.subr.bf16.mxu0 0
      %824 = vmatpush1.bf16.msra.mxu0 %v783
      %825 = vmatprep.subr.bf16.mxu0 0
      %826 = vmatpush1.bf16.msra.mxu0 %v784
      %827 = vmatprep.subr.bf16.mxu0 0
      %828 = vmatpush1.bf16.msra.mxu0 0
      %829 = vmatprep.subr.bf16.mxu0 0
      %830 = vmatpush1.bf16.msra.mxu0 0
      %831 = vmatprep.subr.bf16.mxu0 0
      %832 = vmatpush1.bf16.msra.mxu0 0
      %833 = vmatprep.subr.bf16.mxu0 0
      %834 = vmatpush1.bf16.msra.mxu0 0
      %835 = vmatprep.subr.bf16.mxu0 0
      %836 = vmatpush1.bf16.msra.mxu0 0
      %837 = vmatprep.subr.bf16.mxu0 0
      %838 = vmatpush1.bf16.msra.mxu0 0
      %839 = vmatprep.subr.bf16.mxu0 0
      %840 = vmatpush1.bf16.msra.mxu0 0
      %841 = vmatprep.subr.bf16.mxu0 0
      %842 = vmatpush1.bf16.msra.mxu0 0
      %843 = vmatprep.subr.bf16.mxu0 0
      %844 = vmatpush1.bf16.msra.mxu0 0
      %845 = vmatprep.subr.bf16.mxu0 0
      %846 = vmatpush1.bf16.msra.mxu0 0
      %847 = vmatprep.mubr.bf16.mxu0 0
      %848 = vmatmul.mubr.bf16.gmra.mrb[0].mxu0 %v792
      %v849 = vpop.f32.mrb[0].mxu0
      %v850 = vadd.f32 0.0, %v849
      %v851 = vpop.f32.mrb[0].mxu0
      %v852 = vpop.f32.mrb[0].mxu0
      %v853 = vadd.f32 0.0, %v852
      %v854 = vpop.f32.mrb[0].mxu0
      %855 = vmatprep.mubr.bf16.mxu0 0
      %856 = vmatmul.mubr.bf16.gmra.mrb[0].mxu0 %v795
      %v857 = vpop.f32.mrb[0].mxu0
      %v858 = vadd.f32 0.0, %v857
      %v859 = vpop.f32.mrb[0].mxu0
      %v860 = vpop.f32.mrb[0].mxu0
      %v861 = vadd.f32 0.0, %v860
      %v862 = vpop.f32.mrb[0].mxu0
      %863 = vmatprep.mubr.bf16.mxu0 0
      %864 = vmatmul.mubr.bf16.gmra.mrb[0].mxu0 %v798
      %v865 = vpop.f32.mrb[0].mxu0
      %v866 = vadd.f32 0.0, %v865
      %v867 = vpop.f32.mrb[0].mxu0
      %v868 = vpop.f32.mrb[0].mxu0
      %v869 = vadd.f32 0.0, %v868
      %v870 = vpop.f32.mrb[0].mxu0
      %871 = vmatprep.mubr.bf16.mxu0 0
      %872 = vmatmul.mubr.bf16.gmra.mrb[0].mxu0 %v801
      %v873 = vpop.f32.mrb[0].mxu0
      %v874 = vadd.f32 0.0, %v873
      %v875 = vpop.f32.mrb[0].mxu0
      %v876 = vpop.f32.mrb[0].mxu0
      %v877 = vadd.f32 0.0, %v876
      %v878 = vpop.f32.mrb[0].mxu0
      %879 = vmatprep.mubr.bf16.mxu0 0
      %880 = vmatmul.mubr.bf16.gmra.mrb[0].mxu0 %v804
      %v881 = vpop.f32.mrb[0].mxu0
      %v882 = vadd.f32 0.0, %v881
      %v883 = vpop.f32.mrb[0].mxu0
      %v884 = vpop.f32.mrb[0].mxu0
      %v885 = vadd.f32 0.0, %v884
      %v886 = vpop.f32.mrb[0].mxu0
      %887 = vmatprep.mubr.bf16.mxu0 0
      %888 = vmatmul.mubr.bf16.gmra.mrb[0].mxu0 %v807
      %v889 = vpop.f32.mrb[0].mxu0
      %v890 = vadd.f32 0.0, %v889
      %v891 = vpop.f32.mrb[0].mxu0
      %v892 = vpop.f32.mrb[0].mxu0
      %v893 = vadd.f32 0.0, %v892
      %v894 = vpop.f32.mrb[0].mxu0
      %895 = vmatprep.mubr.bf16.mxu0 0
      %896 = vmatmul.mubr.bf16.gmra.mrb[0].mxu0 %v810
      %v897 = vpop.f32.mrb[0].mxu0
      %v898 = vadd.f32 0.0, %v897
      %v899 = vpop.f32.mrb[0].mxu0
      %v900 = vpop.f32.mrb[0].mxu0
      %v901 = vadd.f32 0.0, %v900
      %v902 = vpop.f32.mrb[0].mxu0
      %903 = vmatprep.mubr.bf16.mxu0 0
      %904 = vmatmul.mubr.bf16.gmra.mrb[0].mxu0 %v813
      %v905 = vpop.f32.mrb[0].mxu0
      %v906 = vadd.f32 0.0, %v905
      %v907 = vpop.f32.mrb[0].mxu0
      %v908 = vpop.f32.mrb[0].mxu0
      %v909 = vadd.f32 0.0, %v908
      %v910 = vpop.f32.mrb[0].mxu0
      %911 = vdwg.mxu0
      %v912 = vadd.f32 %v620, %v850
      %v913 = vadd.f32 %v623, %v853
      %v914 = vadd.f32 %v628, %v858
      %v915 = vadd.f32 %v631, %v861
      %v916 = vadd.f32 %v636, %v866
      %v917 = vadd.f32 %v639, %v869
      %v918 = vadd.f32 %v644, %v874
      %v919 = vadd.f32 %v647, %v877
      %v920 = vadd.f32 %v652, %v882
      %v921 = vadd.f32 %v655, %v885
      %v922 = vadd.f32 %v660, %v890
      %v923 = vadd.f32 %v663, %v893
      %v924 = vadd.f32 %v668, %v898
      %v925 = vadd.f32 %v671, %v901
      %v926 = vadd.f32 %v676, %v906
      %v927 = vadd.f32 %v679, %v909
      %v928 = vld [vmem:[%s2] sm:$0x1]
      %v930 = vlaneseq
      %v931 = vshrl.u32 %v930, 7
      %v932 = vsub.s32 0, %v931
      %v933 = vrot.slane %v928, %v932
      %v935 = vmul.f32 %v912, %v933
      %v936 = vmul.f32 %v913, %v933
      %v937 = vmul.f32 %v914, %v933
      %v938 = vmul.f32 %v915, %v933
      %v939 = vmul.f32 %v916, %v933
      %v940 = vmul.f32 %v917, %v933
      %v941 = vmul.f32 %v918, %v933
      %v942 = vmul.f32 %v919, %v933
      %v943 = vmul.f32 %v920, %v933
      %v944 = vmul.f32 %v921, %v933
      %v945 = vmul.f32 %v922, %v933
      %v946 = vmul.f32 %v923, %v933
      %v947 = vmul.f32 %v924, %v933
      %v948 = vmul.f32 %v925, %v933
      %v949 = vmul.f32 %v926, %v933
      %v950 = vmul.f32 %v927, %v933
      %v951 = vld [vmem:[%s3] sm:$0x1]
      %v953 = vlaneseq
      %v954 = vshrl.u32 %v953, 7
      %v955 = vsub.s32 0, %v954
      %v956 = vrot.slane %v951, %v955
      %v958 = vadd.f32 %v935, %v956
      %v959 = vadd.f32 %v936, %v956
      %v960 = vadd.f32 %v937, %v956
      %v961 = vadd.f32 %v938, %v956
      %v962 = vadd.f32 %v939, %v956
      %v963 = vadd.f32 %v940, %v956
      %v964 = vadd.f32 %v941, %v956
      %v965 = vadd.f32 %v942, %v956
      %v966 = vadd.f32 %v943, %v956
      %v967 = vadd.f32 %v944, %v956
      %v968 = vadd.f32 %v945, %v956
      %v969 = vadd.f32 %v946, %v956
      %v970 = vadd.f32 %v947, %v956
      %v971 = vadd.f32 %v948, %v956
      %v972 = vadd.f32 %v949, %v956
      %v973 = vadd.f32 %v950, %v956
      %v974 = vmax.f32 %v958, 0.0
      %v975 = vmax.f32 %v959, 0.0
      %v976 = vmax.f32 %v960, 0.0
      %v977 = vmax.f32 %v961, 0.0
      %v978 = vmax.f32 %v962, 0.0
      %v979 = vmax.f32 %v963, 0.0
      %v980 = vmax.f32 %v964, 0.0
      %v981 = vmax.f32 %v965, 0.0
      %v982 = vmax.f32 %v966, 0.0
      %v983 = vmax.f32 %v967, 0.0
      %v984 = vmax.f32 %v968, 0.0
      %v985 = vmax.f32 %v969, 0.0
      %v986 = vmax.f32 %v970, 0.0
      %v987 = vmax.f32 %v971, 0.0
      %v988 = vmax.f32 %v972, 0.0
      %v989 = vmax.f32 %v973, 0.0
      %v990 = vpack.c.bf16 %v975, %v974
      %v991 = vpack.c.bf16 %v977, %v976
      %v992 = vpack.c.bf16 %v979, %v978
      %v993 = vpack.c.bf16 %v981, %v980
      %v994 = vpack.c.bf16 %v983, %v982
      %v995 = vpack.c.bf16 %v985, %v984
      %v996 = vpack.c.bf16 %v987, %v986
      %v997 = vpack.c.bf16 %v989, %v988
      %v1006 = vunpack.c.l.b16 %v990
      %v1007 = vunpack.c.h.b16 %v990
      %v1008 = vunpack.c.l.b16 %v991
      %v1009 = vunpack.c.h.b16 %v991
      %v1010 = vunpack.c.l.b16 %v992
      %v1011 = vunpack.c.h.b16 %v992
      %v1012 = vunpack.c.l.b16 %v993
      %v1013 = vunpack.c.h.b16 %v993
      %v1014 = vunpack.c.l.b16 %v994
      %v1015 = vunpack.c.h.b16 %v994
      %v1016 = vunpack.c.l.b16 %v995
      %v1017 = vunpack.c.h.b16 %v995
      %v1018 = vunpack.c.l.b16 %v996
      %v1019 = vunpack.c.h.b16 %v996
      %v1020 = vunpack.c.l.b16 %v997
      %v1021 = vunpack.c.h.b16 %v997
      %v1022 = vpack.c.b16 %v1006, %v1006
      %v1023 = vpack.c.b16 %v1007, %v1007
      %v1024 = vpack.c.b16 %v1008, %v1008
      %v1025 = vpack.c.b16 %v1009, %v1009
      %v1026 = vpack.c.b16 %v1010, %v1010
      %v1027 = vpack.c.b16 %v1011, %v1011
      %v1028 = vpack.c.b16 %v1012, %v1012
      %v1029 = vpack.c.b16 %v1013, %v1013
      %v1030 = vpack.c.b16 %v1014, %v1014
      %v1031 = vpack.c.b16 %v1015, %v1015
      %v1032 = vpack.c.b16 %v1016, %v1016
      %v1033 = vpack.c.b16 %v1017, %v1017
      %v1034 = vpack.c.b16 %v1018, %v1018
      %v1035 = vpack.c.b16 %v1019, %v1019
      %v1036 = vpack.c.b16 %v1020, %v1020
      %v1037 = vpack.c.b16 %v1021, %v1021
      %vm1054 = vcmask 257024
      %1055 = vst.msk [vmem:[%s219] sm:$0xf] %vm1054, %v1022
      %1056 = vst.msk [vmem:[%s219 + $0x4] sm:$0xf] %vm1054, %v1023
      %1057 = vst.msk [vmem:[%s219 + $0x8] sm:$0xf] %vm1054, %v1024
      %1058 = vst.msk [vmem:[%s219 + $0xc] sm:$0xf] %vm1054, %v1025
      %1059 = vst.msk [vmem:[%s219 + $0x10] sm:$0xf] %vm1054, %v1026
      %1060 = vst.msk [vmem:[%s219 + $0x14] sm:$0xf] %vm1054, %v1027
      %1061 = vst.msk [vmem:[%s219 + $0x18] sm:$0xf] %vm1054, %v1028
      %1062 = vst.msk [vmem:[%s219 + $0x1c] sm:$0xf] %vm1054, %v1029
      %1063 = vst.msk [vmem:[%s219 + $0x20] sm:$0xf] %vm1054, %v1030
      %1064 = vst.msk [vmem:[%s219 + $0x24] sm:$0xf] %vm1054, %v1031
      %1065 = vst.msk [vmem:[%s219 + $0x28] sm:$0xf] %vm1054, %v1032
      %1066 = vst.msk [vmem:[%s219 + $0x2c] sm:$0xf] %vm1054, %v1033
      %1067 = vst.msk [vmem:[%s219 + $0x30] sm:$0xf] %vm1054, %v1034
      %1068 = vst.msk [vmem:[%s219 + $0x34] sm:$0xf] %vm1054, %v1035
      %1069 = vst.msk [vmem:[%s219 + $0x38] sm:$0xf] %vm1054, %v1036
      %1070 = vst.msk [vmem:[%s219 + $0x3c] sm:$0xf] %vm1054, %v1037
      %s1071 = smul.u32 16, %s20
      %p1072 = scmp.lt.s32.totalorder %s19, 1
      %s1073 = scalar_select %p1072, %s19, 1
      %p1074 = scmp.lt.s32.totalorder %s1071, 31
      %s1075 = scalar_select %p1074, %s1071, 31
      %s1076 = smul.addr %s1073, 32
      %s1077 = sadd.s32 %s1075, %s1076
      %s1078 = smul.addr %s1077, 4
      %s1079 = scalar_lea.vmem %s4, %s1078
      // Predicated region
      $region37: #{bottleneck_forward_pallas.4} parent=35 // pred_check
        %p1080 = pneg %p136
      $region38: #{bottleneck_forward_pallas.4} parent=35 // pred_check_branch
        %1082 = sbr.rel (%p1080) target = $region40
      $region39: #{bottleneck_forward_pallas.4} parent=35 // pred_region
        %s1083 = smul.u32 16, %s20
      $region40: #{bottleneck_forward_pallas.4} parent=35 // pred_fallthru
        _
    $region36: #{bottleneck_forward_pallas.4} parent=5 // pred_fallthru
      _
    %p1084 = scmp.le.s32.totalorder 2, %s10
    // Predicated region
    $region41: #{bottleneck_forward_pallas.4} parent=5 // pred_check
      %p1085 = pneg %p1084
    $region42: #{bottleneck_forward_pallas.4} parent=5 // pred_check_branch
      %1087 = sbr.rel (%p1085) target = $region44
    $region43: #{bottleneck_forward_pallas.4} parent=5 // pred_region
      %s1088 = ssub.s32 %s10, 2
      // Predicated region
      $region45: #{bottleneck_forward_pallas.4} parent=43 // pred_check
        %p1089 = pneg %p142
      $region46: #{bottleneck_forward_pallas.4} parent=43 // pred_check_branch
        %1091 = sbr.rel (%p1089) target = $region48
      $region47: #{bottleneck_forward_pallas.4} parent=43 // pred_region
        %s1092 = smul.u32 16, %s22
        %p1093 = scmp.lt.s32.totalorder %s21, 1
        %s1094 = scalar_select %p1093, %s21, 1
        %p1095 = scmp.lt.s32.totalorder %s1092, 31
        %s1096 = scalar_select %p1095, %s1092, 31
        %s1097 = smul.addr %s1094, 32
        %s1098 = sadd.s32 %s1096, %s1097
        %s1099 = smul.addr %s1098, 4
        %s1100 = scalar_lea.vmem %s4, %s1099
      $region48: #{bottleneck_forward_pallas.4} parent=43 // pred_fallthru
        _
    $region44: #{bottleneck_forward_pallas.4} parent=5 // pred_fallthru
      _
  $region6: #{bottleneck_forward_pallas.4} parent=0 // loop_footer
    %s14 = sadd.s32 1, %s10
  $region7: #{bottleneck_forward_pallas.4} parent=0 // loop_footer_branch
    %9 = sbr.rel target = $region3
  $region8: #{bottleneck_forward_pallas.4} parent=0 // loop_exit
    _

// kernel: bottleneck_forward_pallas.5
$region0: #{bottleneck_forward_pallas.5}
  #allocation0 [shape = 'u32[]', space=smem, size = 0x4, offset = 0x4, fixed_abs, tag = 'smem constant byte address 0x4 - core index']
  #allocation1 [shape = 'u32[144,128]{1,0:T(1,128)}', space=vmem, size = 0x12000, scoped, tag = 'internal scratch']
  %s0 = inlined_call_operand.vmem [shape: bf16[512,32], index: 0, kind: input, shape index: {}]
  %s1 = inlined_call_operand.vmem [shape: bf16[32,128], index: 1, kind: input, shape index: {}]
  %s2 = inlined_call_operand.vmem [shape: f32[1,128], index: 2, kind: input, shape index: {}]
  %s3 = inlined_call_operand.vmem [shape: f32[1,128], index: 3, kind: input, shape index: {}]
  %s4 = inlined_call_operand.vmem [shape: bf16[512,128], index: 4, kind: input, shape index: {}]
  %s5 = inlined_call_operand.hbm [shape: f32[512,128], index: 5, kind: output, shape index: {}]
  %s6 = sld [smem:[#allocation0]]
  $region53: #{bottleneck_forward_pallas.5} parent=0
    _
  %s8 = ssub.s32 1, %s6
  %s9 = scalar_select 0, %s8, %s6
  $region1: #{bottleneck_forward_pallas.5} parent=0
    #allocation2 [shape = 'u8[262144]{0}', space=vmem, size = 0x40000, scoped, tag = 'output window, operand 0']
    #allocation3 [shape = 's32[2]{0}', space=sflag, size = 0x8, scoped, tag = 'scoped memory for bottleneck_forward_pallas.5']
    %10 = vsyncpa [#allocation3], 0
    %s11 = scalar_lea.sflag [#allocation3], 1
    %12 = vsyncpa %s11, 0
    loop: start=0, step=1, limit=4
    $region2: #{bottleneck_forward_pallas.5} parent=1 // loop_pre_header
      _
    $region3: #{bottleneck_forward_pallas.5} parent=1 // loop_header
      %s14 = sphi 0, %s18
      %p15 = scmp.ge.s32.totalorder %s14, 4
      %s24 = sphi 0, %s26
      %s27 = sphi 0, %s24
      %s28 = sphi 0, %s27
      %s44 = sphi 0, %s28
      %s48 = sphi 0, %s48
      %s50 = sphi 0, %s48
      %s51 = sphi 0, %s50
      %s65 = sphi 0, %s51
      %s69 = sphi 0, %s69
      %s71 = sphi 0, %s69
      %s72 = sphi 0, %s71
      %s86 = sphi 0, %s72
      %s90 = sphi 0, %s90
      %s92 = sphi 0, %s90
      %s93 = sphi 0, %s92
      %s107 = sphi 0, %s93
      %s113 = sphi 0, %s115
      %s116 = sphi 0, %s113
      %s117 = sphi 0, %s116
      %s133 = sphi 0, %s117
      %s139 = sphi 0, %s141
      %s142 = sphi 0, %s139
      %s143 = sphi 0, %s142
      %s159 = sphi 0, %s143
    $region4: #{bottleneck_forward_pallas.5} parent=1 // loop_header_branch
      %17 = sbr.rel (%p15) target = $region8
    $region5: #{bottleneck_forward_pallas.5} parent=1 // loop_body
      %s19 = ssub.s32 %s14, 1
      %s20 = ssub.s32 %s14, 2
      %s21 = sadd.s32 %s14, 1
      %s22 = ssub.s32 %s14, %s21
      %p23 = scmp.eq.s32.totalorder %s22, 0
      %s25 = sadd.s32 %s24, 1
      %s26 = scalar_select %p23, %s24, %s25
      %p29 = pneg %p23
      %p30 = scmp.eq.s32.totalorder %s14, 1
      %p31 = por %p29, %p30
      %p32 = scmp.ne.s32.totalorder %s24, %s27
      %p33 = scmp.eq.s32.totalorder %s14, 0
      %p34 = por %p32, %p33
      %p35 = scmp.ne.s32.totalorder %s24, %s27
      %p36 = scmp.eq.s32.totalorder %s19, 1
      %p37 = por %p35, %p36
      %p38 = scmp.ne.s32.totalorder %s27, %s28
      %p39 = scmp.eq.s32.totalorder %s19, 0
      %p40 = por %p38, %p39
      %p41 = scmp.ne.s32.totalorder %s27, %s28
      %p42 = scmp.eq.s32.totalorder %s20, 1
      %p43 = por %p41, %p42
      %p45 = scmp.ne.s32.totalorder %s28, %s44
      %p46 = scmp.eq.s32.totalorder %s20, 0
      %p47 = por %p45, %p46
      %s49 = sadd.s32 %s48, 1
      %p52 = scmp.eq.s32.totalorder %s14, 1
      %p53 = scmp.ne.s32.totalorder %s48, %s50
      %p54 = scmp.eq.s32.totalorder %s14, 0
      %p55 = por %p53, %p54
      %p56 = scmp.ne.s32.totalorder %s48, %s50
      %p57 = scmp.eq.s32.totalorder %s19, 1
      %p58 = por %p56, %p57
      %p59 = scmp.ne.s32.totalorder %s50, %s51
      %p60 = scmp.eq.s32.totalorder %s19, 0
      %p61 = por %p59, %p60
      %p62 = scmp.ne.s32.totalorder %s50, %s51
      %p63 = scmp.eq.s32.totalorder %s20, 1
      %p64 = por %p62, %p63
      %p66 = scmp.ne.s32.totalorder %s51, %s65
      %p67 = scmp.eq.s32.totalorder %s20, 0
      %p68 = por %p66, %p67
      %s70 = sadd.s32 %s69, 1
      %p73 = scmp.eq.s32.totalorder %s14, 1
      %p74 = scmp.ne.s32.totalorder %s69, %s71
      %p75 = scmp.eq.s32.totalorder %s14, 0
      %p76 = por %p74, %p75
      %p77 = scmp.ne.s32.totalorder %s69, %s71
      %p78 = scmp.eq.s32.totalorder %s19, 1
      %p79 = por %p77, %p78
      %p80 = scmp.ne.s32.totalorder %s71, %s72
      %p81 = scmp.eq.s32.totalorder %s19, 0
      %p82 = por %p80, %p81
      %p83 = scmp.ne.s32.totalorder %s71, %s72
      %p84 = scmp.eq.s32.totalorder %s20, 1
      %p85 = por %p83, %p84
      %p87 = scmp.ne.s32.totalorder %s72, %s86
      %p88 = scmp.eq.s32.totalorder %s20, 0
      %p89 = por %p87, %p88
      %s91 = sadd.s32 %s90, 1
      %p94 = scmp.eq.s32.totalorder %s14, 1
      %p95 = scmp.ne.s32.totalorder %s90, %s92
      %p96 = scmp.eq.s32.totalorder %s14, 0
      %p97 = por %p95, %p96
      %p98 = scmp.ne.s32.totalorder %s90, %s92
      %p99 = scmp.eq.s32.totalorder %s19, 1
      %p100 = por %p98, %p99
      %p101 = scmp.ne.s32.totalorder %s92, %s93
      %p102 = scmp.eq.s32.totalorder %s19, 0
      %p103 = por %p101, %p102
      %p104 = scmp.ne.s32.totalorder %s92, %s93
      %p105 = scmp.eq.s32.totalorder %s20, 1
      %p106 = por %p104, %p105
      %p108 = scmp.ne.s32.totalorder %s93, %s107
      %p109 = scmp.eq.s32.totalorder %s20, 0
      %p110 = por %p108, %p109
      %s111 = ssub.s32 %s14, %s21
      %p112 = scmp.eq.s32.totalorder %s111, 0
      %s114 = sadd.s32 %s113, 1
      %s115 = scalar_select %p112, %s113, %s114
      %p118 = pneg %p112
      %p119 = scmp.eq.s32.totalorder %s14, 1
      %p120 = por %p118, %p119
      %p121 = scmp.ne.s32.totalorder %s113, %s116
      %p122 = scmp.eq.s32.totalorder %s14, 0
      %p123 = por %p121, %p122
      %p124 = scmp.ne.s32.totalorder %s113, %s116
      %p125 = scmp.eq.s32.totalorder %s19, 1
      %p126 = por %p124, %p125
      %p127 = scmp.ne.s32.totalorder %s116, %s117
      %p128 = scmp.eq.s32.totalorder %s19, 0
      %p129 = por %p127, %p128
      %p130 = scmp.ne.s32.totalorder %s116, %s117
      %p131 = scmp.eq.s32.totalorder %s20, 1
      %p132 = por %p130, %p131
      %p134 = scmp.ne.s32.totalorder %s117, %s133
      %p135 = scmp.eq.s32.totalorder %s20, 0
      %p136 = por %p134, %p135
      %s137 = ssub.s32 %s14, %s21
      %p138 = scmp.eq.s32.totalorder %s137, 0
      %s140 = sadd.s32 %s139, 1
      %s141 = scalar_select %p138, %s139, %s140
      %p144 = pneg %p138
      %p145 = scmp.eq.s32.totalorder %s14, 1
      %p146 = por %p144, %p145
      %p147 = scmp.ne.s32.totalorder %s139, %s142
      %p148 = scmp.eq.s32.totalorder %s14, 0
      %p149 = por %p147, %p148
      %p150 = scmp.ne.s32.totalorder %s139, %s142
      %p151 = scmp.eq.s32.totalorder %s19, 1
      %p152 = por %p150, %p151
      %p153 = scmp.ne.s32.totalorder %s142, %s143
      %p154 = scmp.eq.s32.totalorder %s19, 0
      %p155 = por %p153, %p154
      %p156 = scmp.ne.s32.totalorder %s142, %s143
      %p157 = scmp.eq.s32.totalorder %s20, 1
      %p158 = por %p156, %p157
      %p160 = scmp.ne.s32.totalorder %s143, %s159
      %p161 = scmp.eq.s32.totalorder %s20, 0
      %p162 = por %p160, %p161
      %p163 = scmp.le.s32.totalorder 1, %s14
      %p164 = scmp.lt.s32.totalorder %s14, 3
      %p165 = pnand %p163, %p164
      %p166 = pneg %p165
      // Predicated region
      $region9: #{bottleneck_forward_pallas.5} parent=5 // pred_check
        _
      $region10: #{bottleneck_forward_pallas.5} parent=5 // pred_check_branch
        %168 = sbr.rel (%p165) target = $region12
      $region11: #{bottleneck_forward_pallas.5} parent=5 // pred_region
        %s169 = ssub.s32 %s14, 1
        // Predicated region
        $region13: #{bottleneck_forward_pallas.5} parent=11 // pred_check
          %p170 = pneg %p61
        $region14: #{bottleneck_forward_pallas.5} parent=11 // pred_check_branch
          %172 = sbr.rel (%p170) target = $region16
        $region15: #{bottleneck_forward_pallas.5} parent=11 // pred_region
          _
        $region16: #{bottleneck_forward_pallas.5} parent=11 // pred_fallthru
          _
        // Predicated region
        $region17: #{bottleneck_forward_pallas.5} parent=11 // pred_check
          %p173 = pneg %p82
        $region18: #{bottleneck_forward_pallas.5} parent=11 // pred_check_branch
          %175 = sbr.rel (%p173) target = $region20
        $region19: #{bottleneck_forward_pallas.5} parent=11 // pred_region
          _
        $region20: #{bottleneck_forward_pallas.5} parent=11 // pred_fallthru
          _
        // Predicated region
        $region21: #{bottleneck_forward_pallas.5} parent=11 // pred_check
          %p176 = pneg %p103
        $region22: #{bottleneck_forward_pallas.5} parent=11 // pred_check_branch
          %178 = sbr.rel (%p176) target = $region24
        $region23: #{bottleneck_forward_pallas.5} parent=11 // pred_region
          _
        $region24: #{bottleneck_forward_pallas.5} parent=11 // pred_fallthru
          _
      $region12: #{bottleneck_forward_pallas.5} parent=5 // pred_fallthru
        _
      %p179 = scmp.lt.s32.totalorder %s14, 2
      // Predicated region
      $region25: #{bottleneck_forward_pallas.5} parent=5 // pred_check
        %p180 = pneg %p179
      $region26: #{bottleneck_forward_pallas.5} parent=5 // pred_check_branch
        %182 = sbr.rel (%p180) target = $region28
      $region27: #{bottleneck_forward_pallas.5} parent=5 // pred_region
        // Predicated region
        $region29: #{bottleneck_forward_pallas.5} parent=27 // pred_check
          %p183 = pneg %p34
        $region30: #{bottleneck_forward_pallas.5} parent=27 // pred_check_branch
          %185 = sbr.rel (%p183) target = $region32
        $region31: #{bottleneck_forward_pallas.5} parent=27 // pred_region
          %s186 = smul.u32 32, %s14
          %p187 = scmp.lt.s32.totalorder %s186, 63
          %s188 = scalar_select %p187, %s186, 63
          %s189 = smul.addr %s188, 4
          %s190 = scalar_lea.vmem %s0, %s189
          %s191 = smul.u32 32, %s14
        $region32: #{bottleneck_forward_pallas.5} parent=27 // pred_fallthru
          _
        // Predicated region
        $region33: #{bottleneck_forward_pallas.5} parent=27 // pred_check
          %p192 = pneg %p123
        $region34: #{bottleneck_forward_pallas.5} parent=27 // pred_check_branch
          %194 = sbr.rel (%p192) target = $region36
        $region35: #{bottleneck_forward_pallas.5} parent=27 // pred_region
          %s195 = smul.u32 32, %s14
          %p196 = scmp.lt.s32.totalorder %s195, 63
          %s197 = scalar_select %p196, %s195, 63
          %s198 = smul.addr %s197, 4
          %s199 = scalar_lea.vmem %s4, %s198
          %s200 = smul.u32 32, %s14
        $region36: #{bottleneck_forward_pallas.5} parent=27 // pred_fallthru
          _
      $region28: #{bottleneck_forward_pallas.5} parent=5 // pred_fallthru
        _
      %p201 = scmp.le.s32.totalorder 1, %s14
      %p202 = scmp.lt.s32.totalorder %s14, 3
      %p203 = pnand %p201, %p202
      %p204 = pneg %p203
      // Predicated region
      $region37: #{bottleneck_forward_pallas.5} parent=5 // pred_check
        _
      $region38: #{bottleneck_forward_pallas.5} parent=5 // pred_check_branch
        %206 = sbr.rel (%p203) target = $region40
      $region39: #{bottleneck_forward_pallas.5} parent=5 // pred_region
        %s207 = ssub.s32 %s14, 1
        %s208 = smul.u32 32, %s19
        %p209 = scmp.lt.s32.totalorder %s208, 63
        %s210 = scalar_select %p209, %s208, 63
        %s211 = smul.addr %s210, 4
        %s212 = scalar_lea.vmem %s0, %s211
        %p213 = pneg %p40
        %p214 = pneg %p37
        %p215 = pneg %p61
        %p216 = pneg %p58
        %p217 = pneg %p82
        %p218 = pneg %p79
        %p219 = pneg %p103
        %p220 = pneg %p100
        %s221 = smul.u32 32, %s19
        %p222 = scmp.lt.s32.totalorder %s221, 63
        %s223 = scalar_select %p222, %s221, 63
        %s224 = smul.addr %s223, 4
        %s225 = scalar_lea.vmem %s4, %s224
        %p226 = pneg %p129
        %p227 = pneg %p126
        %p228 = pneg %p155
        %p229 = pneg %p152
        %s230 = sand.u32 %s142, 1
        %s231 = scalar_lea.sflag [#allocation3], %s230
        %s232 = sand.u32 %s142, 1
        %s233 = smul.addr %s232, 256
        %s234 = scalar_lea.vmem [#allocation2], %s233
        %s235 = smul.u32 32, %s19
        %p236 = scmp.lt.s32.totalorder %s235, 63
        %s237 = scalar_select %p236, %s235, 63
        %s238 = smul.addr %s237, 4
        %s239 = scalar_lea.vmem %s0, %s238
        %s240 = smul.u32 32, %s19
        %s241 = smul.u32 32, %s19
        %p242 = scmp.lt.s32.totalorder %s241, 63
        %s243 = scalar_select %p242, %s241, 63
        %s244 = smul.addr %s243, 4
        %s245 = scalar_lea.vmem %s4, %s244
        %s246 = smul.u32 32, %s19
        %s247 = smul.u32 32, %s19
        %v249 = vld [vmem:[%s239] sm:$0xf]
        %v250 = vld [vmem:[%s239 + $0x4] sm:$0xf]
        %v251 = vld [vmem:[%s239 + $0x8] sm:$0xf]
        %v252 = vld [vmem:[%s239 + $0xc] sm:$0xf]
        %v253 = vld [vmem:[%s239 + $0x10] sm:$0xf]
        %v254 = vld [vmem:[%s239 + $0x14] sm:$0xf]
        %v255 = vld [vmem:[%s239 + $0x18] sm:$0xf]
        %v256 = vld [vmem:[%s239 + $0x1c] sm:$0xf]
        %v257 = vld [vmem:[%s239 + $0x20] sm:$0xf]
        %v258 = vld [vmem:[%s239 + $0x24] sm:$0xf]
        %v259 = vld [vmem:[%s239 + $0x28] sm:$0xf]
        %v260 = vld [vmem:[%s239 + $0x2c] sm:$0xf]
        %v261 = vld [vmem:[%s239 + $0x30] sm:$0xf]
        %v262 = vld [vmem:[%s239 + $0x34] sm:$0xf]
        %v263 = vld [vmem:[%s239 + $0x38] sm:$0xf]
        %v264 = vld [vmem:[%s239 + $0x3c] sm:$0xf]
        %v265 = vld [vmem:[%s239 + $0x40] sm:$0xf]
        %v266 = vld [vmem:[%s239 + $0x44] sm:$0xf]
        %v267 = vld [vmem:[%s239 + $0x48] sm:$0xf]
        %v268 = vld [vmem:[%s239 + $0x4c] sm:$0xf]
        %v269 = vld [vmem:[%s239 + $0x50] sm:$0xf]
        %v270 = vld [vmem:[%s239 + $0x54] sm:$0xf]
        %v271 = vld [vmem:[%s239 + $0x58] sm:$0xf]
        %v272 = vld [vmem:[%s239 + $0x5c] sm:$0xf]
        %v273 = vld [vmem:[%s239 + $0x60] sm:$0xf]
        %v274 = vld [vmem:[%s239 + $0x64] sm:$0xf]
        %v275 = vld [vmem:[%s239 + $0x68] sm:$0xf]
        %v276 = vld [vmem:[%s239 + $0x6c] sm:$0xf]
        %v277 = vld [vmem:[%s239 + $0x70] sm:$0xf]
        %v278 = vld [vmem:[%s239 + $0x74] sm:$0xf]
        %v279 = vld [vmem:[%s239 + $0x78] sm:$0xf]
        %v280 = vld [vmem:[%s239 + $0x7c] sm:$0xf]
        %v281 = vld [vmem:[%s1] sm:$0xf]
        %v282 = vld [vmem:[%s1 + $0x4] sm:$0xf]
        %v283 = vld [vmem:[%s1 + $0x8] sm:$0xf]
        %v284 = vld [vmem:[%s1 + $0xc] sm:$0xf]
        %v317 = vunpack.c.l.b16 %v249
        %v318 = vunpack.c.l.b16 %v250
        %v319 = vunpack.c.l.b16 %v251
        %v320 = vunpack.c.l.b16 %v252
        %v321 = vunpack.c.l.b16 %v253
        %v322 = vunpack.c.l.b16 %v254
        %v323 = vunpack.c.l.b16 %v255
        %v324 = vunpack.c.l.b16 %v256
        %v325 = vunpack.c.l.b16 %v257
        %v326 = vunpack.c.l.b16 %v258
        %v327 = vunpack.c.l.b16 %v259
        %v328 = vunpack.c.l.b16 %v260
        %v329 = vunpack.c.l.b16 %v261
        %v330 = vunpack.c.l.b16 %v262
        %v331 = vunpack.c.l.b16 %v263
        %v332 = vunpack.c.l.b16 %v264
        %v333 = vunpack.c.l.b16 %v265
        %v334 = vunpack.c.l.b16 %v266
        %v335 = vunpack.c.l.b16 %v267
        %v336 = vunpack.c.l.b16 %v268
        %v337 = vunpack.c.l.b16 %v269
        %v338 = vunpack.c.l.b16 %v270
        %v339 = vunpack.c.l.b16 %v271
        %v340 = vunpack.c.l.b16 %v272
        %v341 = vunpack.c.l.b16 %v273
        %v342 = vunpack.c.l.b16 %v274
        %v343 = vunpack.c.l.b16 %v275
        %v344 = vunpack.c.l.b16 %v276
        %v345 = vunpack.c.l.b16 %v277
        %v346 = vunpack.c.l.b16 %v278
        %v347 = vunpack.c.l.b16 %v279
        %v348 = vunpack.c.l.b16 %v280
        %v349 = vpack.c.b16 %v318, %v317
        %v350 = vpack.c.b16 %v320, %v319
        %v351 = vpack.c.b16 %v322, %v321
        %v352 = vpack.c.b16 %v324, %v323
        %v353 = vpack.c.b16 %v326, %v325
        %v354 = vpack.c.b16 %v328, %v327
        %v355 = vpack.c.b16 %v330, %v329
        %v356 = vpack.c.b16 %v332, %v331
        %v357 = vpack.c.b16 %v334, %v333
        %v358 = vpack.c.b16 %v336, %v335
        %v359 = vpack.c.b16 %v338, %v337
        %v360 = vpack.c.b16 %v340, %v339
        %v361 = vpack.c.b16 %v342, %v341
        %v362 = vpack.c.b16 %v344, %v343
        %v363 = vpack.c.b16 %v346, %v345
        %v364 = vpack.c.b16 %v348, %v347
        %v369 = vunpack.c.l.b16 %v281
        %v370 = vunpack.c.l.b16 %v282
        %v371 = vunpack.c.l.b16 %v283
        %v372 = vunpack.c.l.b16 %v284
        %v373 = vpack.c.b16 %v370, %v369
        %v374 = vpack.c.b16 %v372, %v371
        %vm377 = vcmask 261120
        %v379 = vsel %vm377, %v349, 0
        %v382 = vsel %vm377, %v350, 0
        %v385 = vsel %vm377, %v351, 0
        %v388 = vsel %vm377, %v352, 0
        %v391 = vsel %vm377, %v353, 0
        %v394 = vsel %vm377, %v354, 0
        %v397 = vsel %vm377, %v355, 0
        %v400 = vsel %vm377, %v356, 0
        %v403 = vsel %vm377, %v357, 0
        %v406 = vsel %vm377, %v358, 0
        %v409 = vsel %vm377, %v359, 0
        %v412 = vsel %vm377, %v360, 0
        %v415 = vsel %vm377, %v361, 0
        %v418 = vsel %vm377, %v362, 0
        %v421 = vsel %vm377, %v363, 0
        %v424 = vsel %vm377, %v364, 0
        %426 = vmatprep.subr.bf16.mxu0 0
        %427 = vmatpush1.bf16.msra.mxu0 %v373
        %428 = vmatprep.subr.bf16.mxu0 0
        %429 = vmatpush1.bf16.msra.mxu0 %v374
        %430 = vmatprep.subr.bf16.mxu0 0
        %431 = vmatpush1.bf16.msra.mxu0 0
        %432 = vmatprep.subr.bf16.mxu0 0
        %433 = vmatpush1.bf16.msra.mxu0 0
        %434 = vmatprep.subr.bf16.mxu0 0
        %435 = vmatpush1.bf16.msra.mxu0 0
        %436 = vmatprep.subr.bf16.mxu0 0
        %437 = vmatpush1.bf16.msra.mxu0 0
        %438 = vmatprep.subr.bf16.mxu0 0
        %439 = vmatpush1.bf16.msra.mxu0 0
        %440 = vmatprep.subr.bf16.mxu0 0
        %441 = vmatpush1.bf16.msra.mxu0 0
        %442 = vmatprep.subr.bf16.mxu0 0
        %443 = vmatpush1.bf16.msra.mxu0 0
        %444 = vmatprep.subr.bf16.mxu0 0
        %445 = vmatpush1.bf16.msra.mxu0 0
        %446 = vmatprep.subr.bf16.mxu0 0
        %447 = vmatpush1.bf16.msra.mxu0 0
        %448 = vmatprep.subr.bf16.mxu0 0
        %449 = vmatpush1.bf16.msra.mxu0 0
        %450 = vmatprep.subr.bf16.mxu0 0
        %451 = vmatpush1.bf16.msra.mxu0 0
        %452 = vmatprep.subr.bf16.mxu0 0
        %453 = vmatpush1.bf16.msra.mxu0 0
        %454 = vmatprep.subr.bf16.mxu0 0
        %455 = vmatpush1.bf16.msra.mxu0 0
        %456 = vmatprep.subr.bf16.mxu0 0
        %457 = vmatpush1.bf16.msra.mxu0 0
        %458 = vmatprep.mubr.bf16.mxu0 0
        %459 = vmatmul.mubr.bf16.gmra.mrb[0].mxu0 %v379
        %v460 = vpop.f32.mrb[0].mxu0
        %v461 = vadd.f32 0.0, %v460
        %v462 = vpop.f32.mrb[0].mxu0
        %v463 = vpop.f32.mrb[0].mxu0
        %v464 = vadd.f32 0.0, %v463
        %v465 = vpop.f32.mrb[0].mxu0
        %466 = vmatprep.mubr.bf16.mxu0 0
        %467 = vmatmul.mubr.bf16.gmra.mrb[0].mxu0 %v382
        %v468 = vpop.f32.mrb[0].mxu0
        %v469 = vadd.f32 0.0, %v468
        %v470 = vpop.f32.mrb[0].mxu0
        %v471 = vpop.f32.mrb[0].mxu0
        %v472 = vadd.f32 0.0, %v471
        %v473 = vpop.f32.mrb[0].mxu0
        %474 = vmatprep.mubr.bf16.mxu0 0
        %475 = vmatmul.mubr.bf16.gmra.mrb[0].mxu0 %v385
        %v476 = vpop.f32.mrb[0].mxu0
        %v477 = vadd.f32 0.0, %v476
        %v478 = vpop.f32.mrb[0].mxu0
        %v479 = vpop.f32.mrb[0].mxu0
        %v480 = vadd.f32 0.0, %v479
        %v481 = vpop.f32.mrb[0].mxu0
        %482 = vmatprep.mubr.bf16.mxu0 0
        %483 = vmatmul.mubr.bf16.gmra.mrb[0].mxu0 %v388
        %v484 = vpop.f32.mrb[0].mxu0
        %v485 = vadd.f32 0.0, %v484
        %v486 = vpop.f32.mrb[0].mxu0
        %v487 = vpop.f32.mrb[0].mxu0
        %v488 = vadd.f32 0.0, %v487
        %v489 = vpop.f32.mrb[0].mxu0
        %490 = vmatprep.mubr.bf16.mxu0 0
        %491 = vmatmul.mubr.bf16.gmra.mrb[0].mxu0 %v391
        %v492 = vpop.f32.mrb[0].mxu0
        %v493 = vadd.f32 0.0, %v492
        %v494 = vpop.f32.mrb[0].mxu0
        %v495 = vpop.f32.mrb[0].mxu0
        %v496 = vadd.f32 0.0, %v495
        %v497 = vpop.f32.mrb[0].mxu0
        %498 = vmatprep.mubr.bf16.mxu0 0
        %499 = vmatmul.mubr.bf16.gmra.mrb[0].mxu0 %v394
        %v500 = vpop.f32.mrb[0].mxu0
        %v501 = vadd.f32 0.0, %v500
        %v502 = vpop.f32.mrb[0].mxu0
        %v503 = vpop.f32.mrb[0].mxu0
        %v504 = vadd.f32 0.0, %v503
        %v505 = vpop.f32.mrb[0].mxu0
        %506 = vmatprep.mubr.bf16.mxu0 0
        %507 = vmatmul.mubr.bf16.gmra.mrb[0].mxu0 %v397
        %v508 = vpop.f32.mrb[0].mxu0
        %v509 = vadd.f32 0.0, %v508
        %v510 = vpop.f32.mrb[0].mxu0
        %v511 = vpop.f32.mrb[0].mxu0
        %v512 = vadd.f32 0.0, %v511
        %v513 = vpop.f32.mrb[0].mxu0
        %514 = vmatprep.mubr.bf16.mxu0 0
        %515 = vmatmul.mubr.bf16.gmra.mrb[0].mxu0 %v400
        %v516 = vpop.f32.mrb[0].mxu0
        %v517 = vadd.f32 0.0, %v516
        %v518 = vpop.f32.mrb[0].mxu0
        %v519 = vpop.f32.mrb[0].mxu0
        %v520 = vadd.f32 0.0, %v519
        %v521 = vpop.f32.mrb[0].mxu0
        %522 = vmatprep.mubr.bf16.mxu0 0
        %523 = vmatmul.mubr.bf16.gmra.mrb[0].mxu0 %v403
        %v524 = vpop.f32.mrb[0].mxu0
        %v525 = vadd.f32 0.0, %v524
        %v526 = vpop.f32.mrb[0].mxu0
        %v527 = vpop.f32.mrb[0].mxu0
        %v528 = vadd.f32 0.0, %v527
        %v529 = vpop.f32.mrb[0].mxu0
        %530 = vmatprep.mubr.bf16.mxu0 0
        %531 = vmatmul.mubr.bf16.gmra.mrb[0].mxu0 %v406
        %v532 = vpop.f32.mrb[0].mxu0
        %v533 = vadd.f32 0.0, %v532
        %v534 = vpop.f32.mrb[0].mxu0
        %v535 = vpop.f32.mrb[0].mxu0
        %v536 = vadd.f32 0.0, %v535
        %v537 = vpop.f32.mrb[0].mxu0
        %538 = vmatprep.mubr.bf16.mxu0 0
        %539 = vmatmul.mubr.bf16.gmra.mrb[0].mxu0 %v409
        %v540 = vpop.f32.mrb[0].mxu0
        %v541 = vadd.f32 0.0, %v540
        %v542 = vpop.f32.mrb[0].mxu0
        %v543 = vpop.f32.mrb[0].mxu0
        %v544 = vadd.f32 0.0, %v543
        %v545 = vpop.f32.mrb[0].mxu0
        %546 = vmatprep.mubr.bf16.mxu0 0
        %547 = vmatmul.mubr.bf16.gmra.mrb[0].mxu0 %v412
        %v548 = vpop.f32.mrb[0].mxu0
        %v549 = vadd.f32 0.0, %v548
        %v550 = vpop.f32.mrb[0].mxu0
        %v551 = vpop.f32.mrb[0].mxu0
        %v552 = vadd.f32 0.0, %v551
        %v553 = vpop.f32.mrb[0].mxu0
        %554 = vmatprep.mubr.bf16.mxu0 0
        %555 = vmatmul.mubr.bf16.gmra.mrb[0].mxu0 %v415
        %v556 = vpop.f32.mrb[0].mxu0
        %v557 = vadd.f32 0.0, %v556
        %v558 = vpop.f32.mrb[0].mxu0
        %v559 = vpop.f32.mrb[0].mxu0
        %v560 = vadd.f32 0.0, %v559
        %v561 = vpop.f32.mrb[0].mxu0
        %562 = vmatprep.mubr.bf16.mxu0 0
        %563 = vmatmul.mubr.bf16.gmra.mrb[0].mxu0 %v418
        %v564 = vpop.f32.mrb[0].mxu0
        %v565 = vadd.f32 0.0, %v564
        %v566 = vpop.f32.mrb[0].mxu0
        %v567 = vpop.f32.mrb[0].mxu0
        %v568 = vadd.f32 0.0, %v567
        %v569 = vpop.f32.mrb[0].mxu0
        %570 = vmatprep.mubr.bf16.mxu0 0
        %571 = vmatmul.mubr.bf16.gmra.mrb[0].mxu0 %v421
        %v572 = vpop.f32.mrb[0].mxu0
        %v573 = vadd.f32 0.0, %v572
        %v574 = vpop.f32.mrb[0].mxu0
        %v575 = vpop.f32.mrb[0].mxu0
        %v576 = vadd.f32 0.0, %v575
        %v577 = vpop.f32.mrb[0].mxu0
        %578 = vmatprep.mubr.bf16.mxu0 0
        %579 = vmatmul.mubr.bf16.gmra.mrb[0].mxu0 %v424
        %v580 = vpop.f32.mrb[0].mxu0
        %v581 = vadd.f32 0.0, %v580
        %v582 = vpop.f32.mrb[0].mxu0
        %v583 = vpop.f32.mrb[0].mxu0
        %v584 = vadd.f32 0.0, %v583
        %v585 = vpop.f32.mrb[0].mxu0
        %586 = vdwg.mxu0
        %v587 = vld [vmem:[%s2] sm:$0x1]
        %v589 = vlaneseq
        %v590 = vshrl.u32 %v589, 7
        %v591 = vsub.s32 0, %v590
        %v592 = vrot.slane %v587, %v591
        %v594 = vmul.f32 %v461, %v592
        %v595 = vmul.f32 %v464, %v592
        %v596 = vmul.f32 %v469, %v592
        %v597 = vmul.f32 %v472, %v592
        %v598 = vmul.f32 %v477, %v592
        %v599 = vmul.f32 %v480, %v592
        %v600 = vmul.f32 %v485, %v592
        %v601 = vmul.f32 %v488, %v592
        %v602 = vmul.f32 %v493, %v592
        %v603 = vmul.f32 %v496, %v592
        %v604 = vmul.f32 %v501, %v592
        %v605 = vmul.f32 %v504, %v592
        %v606 = vmul.f32 %v509, %v592
        %v607 = vmul.f32 %v512, %v592
        %v608 = vmul.f32 %v517, %v592
        %v609 = vmul.f32 %v520, %v592
        %v610 = vmul.f32 %v525, %v592
        %v611 = vmul.f32 %v528, %v592
        %v612 = vmul.f32 %v533, %v592
        %v613 = vmul.f32 %v536, %v592
        %v614 = vmul.f32 %v541, %v592
        %v615 = vmul.f32 %v544, %v592
        %v616 = vmul.f32 %v549, %v592
        %v617 = vmul.f32 %v552, %v592
        %v618 = vmul.f32 %v557, %v592
        %v619 = vmul.f32 %v560, %v592
        %v620 = vmul.f32 %v565, %v592
        %v621 = vmul.f32 %v568, %v592
        %v622 = vmul.f32 %v573, %v592
        %v623 = vmul.f32 %v576, %v592
        %v624 = vmul.f32 %v581, %v592
        %v625 = vmul.f32 %v584, %v592
        %v626 = vld [vmem:[%s3] sm:$0x1]
        %v628 = vlaneseq
        %v629 = vshrl.u32 %v628, 7
        %v630 = vsub.s32 0, %v629
        %v631 = vrot.slane %v626, %v630
        %v633 = vadd.f32 %v594, %v631
        %v634 = vadd.f32 %v595, %v631
        %v635 = vadd.f32 %v596, %v631
        %v636 = vadd.f32 %v597, %v631
        %v637 = vadd.f32 %v598, %v631
        %v638 = vadd.f32 %v599, %v631
        %v639 = vadd.f32 %v600, %v631
        %v640 = vadd.f32 %v601, %v631
        %v641 = vadd.f32 %v602, %v631
        %v642 = vadd.f32 %v603, %v631
        %v643 = vadd.f32 %v604, %v631
        %v644 = vadd.f32 %v605, %v631
        %v645 = vadd.f32 %v606, %v631
        %v646 = vadd.f32 %v607, %v631
        %v647 = vadd.f32 %v608, %v631
        %v648 = vadd.f32 %v609, %v631
        %v649 = vadd.f32 %v610, %v631
        %v650 = vadd.f32 %v611, %v631
        %v651 = vadd.f32 %v612, %v631
        %v652 = vadd.f32 %v613, %v631
        %v653 = vadd.f32 %v614, %v631
        %v654 = vadd.f32 %v615, %v631
        %v655 = vadd.f32 %v616, %v631
        %v656 = vadd.f32 %v617, %v631
        %v657 = vadd.f32 %v618, %v631
        %v658 = vadd.f32 %v619, %v631
        %v659 = vadd.f32 %v620, %v631
        %v660 = vadd.f32 %v621, %v631
        %v661 = vadd.f32 %v622, %v631
        %v662 = vadd.f32 %v623, %v631
        %v663 = vadd.f32 %v624, %v631
        %v664 = vadd.f32 %v625, %v631
        %v665 = vld [vmem:[%s245] sm:$0xf]
        %v666 = vld [vmem:[%s245 + $0x4] sm:$0xf]
        %v667 = vld [vmem:[%s245 + $0x8] sm:$0xf]
        %v668 = vld [vmem:[%s245 + $0xc] sm:$0xf]
        %v669 = vld [vmem:[%s245 + $0x10] sm:$0xf]
        %v670 = vld [vmem:[%s245 + $0x14] sm:$0xf]
        %v671 = vld [vmem:[%s245 + $0x18] sm:$0xf]
        %v672 = vld [vmem:[%s245 + $0x1c] sm:$0xf]
        %v673 = vld [vmem:[%s245 + $0x20] sm:$0xf]
        %v674 = vld [vmem:[%s245 + $0x24] sm:$0xf]
        %v675 = vld [vmem:[%s245 + $0x28] sm:$0xf]
        %v676 = vld [vmem:[%s245 + $0x2c] sm:$0xf]
        %v677 = vld [vmem:[%s245 + $0x30] sm:$0xf]
        %v678 = vld [vmem:[%s245 + $0x34] sm:$0xf]
        %v679 = vld [vmem:[%s245 + $0x38] sm:$0xf]
        %v680 = vld [vmem:[%s245 + $0x3c] sm:$0xf]
        %v681 = vld [vmem:[%s245 + $0x40] sm:$0xf]
        %v682 = vld [vmem:[%s245 + $0x44] sm:$0xf]
        %v683 = vld [vmem:[%s245 + $0x48] sm:$0xf]
        %v684 = vld [vmem:[%s245 + $0x4c] sm:$0xf]
        %v685 = vld [vmem:[%s245 + $0x50] sm:$0xf]
        %v686 = vld [vmem:[%s245 + $0x54] sm:$0xf]
        %v687 = vld [vmem:[%s245 + $0x58] sm:$0xf]
        %v688 = vld [vmem:[%s245 + $0x5c] sm:$0xf]
        %v689 = vld [vmem:[%s245 + $0x60] sm:$0xf]
        %v690 = vld [vmem:[%s245 + $0x64] sm:$0xf]
        %v691 = vld [vmem:[%s245 + $0x68] sm:$0xf]
        %v692 = vld [vmem:[%s245 + $0x6c] sm:$0xf]
        %v693 = vld [vmem:[%s245 + $0x70] sm:$0xf]
        %v694 = vld [vmem:[%s245 + $0x74] sm:$0xf]
        %v695 = vld [vmem:[%s245 + $0x78] sm:$0xf]
        %v696 = vld [vmem:[%s245 + $0x7c] sm:$0xf]
        %v697 = vunpack.c.l.bf16 %v665
        %v698 = vunpack.c.l.bf16 %v666
        %v699 = vunpack.c.l.bf16 %v667
        %v700 = vunpack.c.l.bf16 %v668
        %v701 = vunpack.c.l.bf16 %v669
        %v702 = vunpack.c.l.bf16 %v670
        %v703 = vunpack.c.l.bf16 %v671
        %v704 = vunpack.c.l.bf16 %v672
        %v705 = vunpack.c.l.bf16 %v673
        %v706 = vunpack.c.l.bf16 %v674
        %v707 = vunpack.c.l.bf16 %v675
        %v708 = vunpack.c.l.bf16 %v676
        %v709 = vunpack.c.l.bf16 %v677
        %v710 = vunpack.c.l.bf16 %v678
        %v711 = vunpack.c.l.bf16 %v679
        %v712 = vunpack.c.l.bf16 %v680
        %v713 = vunpack.c.l.bf16 %v681
        %v714 = vunpack.c.l.bf16 %v682
        %v715 = vunpack.c.l.bf16 %v683
        %v716 = vunpack.c.l.bf16 %v684
        %v717 = vunpack.c.l.bf16 %v685
        %v718 = vunpack.c.l.bf16 %v686
        %v719 = vunpack.c.l.bf16 %v687
        %v720 = vunpack.c.l.bf16 %v688
        %v721 = vunpack.c.l.bf16 %v689
        %v722 = vunpack.c.l.bf16 %v690
        %v723 = vunpack.c.l.bf16 %v691
        %v724 = vunpack.c.l.bf16 %v692
        %v725 = vunpack.c.l.bf16 %v693
        %v726 = vunpack.c.l.bf16 %v694
        %v727 = vunpack.c.l.bf16 %v695
        %v728 = vunpack.c.l.bf16 %v696
        %v729 = vadd.f32 %v633, %v697
        %v730 = vadd.f32 %v634, %v698
        %v731 = vadd.f32 %v635, %v699
        %v732 = vadd.f32 %v636, %v700
        %v733 = vadd.f32 %v637, %v701
        %v734 = vadd.f32 %v638, %v702
        %v735 = vadd.f32 %v639, %v703
        %v736 = vadd.f32 %v640, %v704
        %v737 = vadd.f32 %v641, %v705
        %v738 = vadd.f32 %v642, %v706
        %v739 = vadd.f32 %v643, %v707
        %v740 = vadd.f32 %v644, %v708
        %v741 = vadd.f32 %v645, %v709
        %v742 = vadd.f32 %v646, %v710
        %v743 = vadd.f32 %v647, %v711
        %v744 = vadd.f32 %v648, %v712
        %v745 = vadd.f32 %v649, %v713
        %v746 = vadd.f32 %v650, %v714
        %v747 = vadd.f32 %v651, %v715
        %v748 = vadd.f32 %v652, %v716
        %v749 = vadd.f32 %v653, %v717
        %v750 = vadd.f32 %v654, %v718
        %v751 = vadd.f32 %v655, %v719
        %v752 = vadd.f32 %v656, %v720
        %v753 = vadd.f32 %v657, %v721
        %v754 = vadd.f32 %v658, %v722
        %v755 = vadd.f32 %v659, %v723
        %v756 = vadd.f32 %v660, %v724
        %v757 = vadd.f32 %v661, %v725
        %v758 = vadd.f32 %v662, %v726
        %v759 = vadd.f32 %v663, %v727
        %v760 = vadd.f32 %v664, %v728
        %v761 = vmax.f32 %v729, 0.0
        %v762 = vmax.f32 %v730, 0.0
        %v763 = vmax.f32 %v731, 0.0
        %v764 = vmax.f32 %v732, 0.0
        %v765 = vmax.f32 %v733, 0.0
        %v766 = vmax.f32 %v734, 0.0
        %v767 = vmax.f32 %v735, 0.0
        %v768 = vmax.f32 %v736, 0.0
        %v769 = vmax.f32 %v737, 0.0
        %v770 = vmax.f32 %v738, 0.0
        %v771 = vmax.f32 %v739, 0.0
        %v772 = vmax.f32 %v740, 0.0
        %v773 = vmax.f32 %v741, 0.0
        %v774 = vmax.f32 %v742, 0.0
        %v775 = vmax.f32 %v743, 0.0
        %v776 = vmax.f32 %v744, 0.0
        %v777 = vmax.f32 %v745, 0.0
        %v778 = vmax.f32 %v746, 0.0
        %v779 = vmax.f32 %v747, 0.0
        %v780 = vmax.f32 %v748, 0.0
        %v781 = vmax.f32 %v749, 0.0
        %v782 = vmax.f32 %v750, 0.0
        %v783 = vmax.f32 %v751, 0.0
        %v784 = vmax.f32 %v752, 0.0
        %v785 = vmax.f32 %v753, 0.0
        %v786 = vmax.f32 %v754, 0.0
        %v787 = vmax.f32 %v755, 0.0
        %v788 = vmax.f32 %v756, 0.0
        %v789 = vmax.f32 %v757, 0.0
        %v790 = vmax.f32 %v758, 0.0
        %v791 = vmax.f32 %v759, 0.0
        %v792 = vmax.f32 %v760, 0.0
        %793 = vst [vmem:[%s234] sm:$0xff] %v761
        %794 = vst [vmem:[%s234 + $0x8] sm:$0xff] %v762
        %795 = vst [vmem:[%s234 + $0x10] sm:$0xff] %v763
        %796 = vst [vmem:[%s234 + $0x18] sm:$0xff] %v764
        %797 = vst [vmem:[%s234 + $0x20] sm:$0xff] %v765
        %798 = vst [vmem:[%s234 + $0x28] sm:$0xff] %v766
        %799 = vst [vmem:[%s234 + $0x30] sm:$0xff] %v767
        %800 = vst [vmem:[%s234 + $0x38] sm:$0xff] %v768
        %801 = vst [vmem:[%s234 + $0x40] sm:$0xff] %v769
        %802 = vst [vmem:[%s234 + $0x48] sm:$0xff] %v770
        %803 = vst [vmem:[%s234 + $0x50] sm:$0xff] %v771
        %804 = vst [vmem:[%s234 + $0x58] sm:$0xff] %v772
        %805 = vst [vmem:[%s234 + $0x60] sm:$0xff] %v773
        %806 = vst [vmem:[%s234 + $0x68] sm:$0xff] %v774
        %807 = vst [vmem:[%s234 + $0x70] sm:$0xff] %v775
        %808 = vst [vmem:[%s234 + $0x78] sm:$0xff] %v776
        %809 = vst [vmem:[%s234 + $0x80] sm:$0xff] %v777
        %810 = vst [vmem:[%s234 + $0x88] sm:$0xff] %v778
        %811 = vst [vmem:[%s234 + $0x90] sm:$0xff] %v779
        %812 = vst [vmem:[%s234 + $0x98] sm:$0xff] %v780
        %813 = vst [vmem:[%s234 + $0xa0] sm:$0xff] %v781
        %814 = vst [vmem:[%s234 + $0xa8] sm:$0xff] %v782
        %815 = vst [vmem:[%s234 + $0xb0] sm:$0xff] %v783
        %816 = vst [vmem:[%s234 + $0xb8] sm:$0xff] %v784
        %817 = vst [vmem:[%s234 + $0xc0] sm:$0xff] %v785
        %818 = vst [vmem:[%s234 + $0xc8] sm:$0xff] %v786
        %819 = vst [vmem:[%s234 + $0xd0] sm:$0xff] %v787
        %820 = vst [vmem:[%s234 + $0xd8] sm:$0xff] %v788
        %821 = vst [vmem:[%s234 + $0xe0] sm:$0xff] %v789
        %822 = vst [vmem:[%s234 + $0xe8] sm:$0xff] %v790
        %823 = vst [vmem:[%s234 + $0xf0] sm:$0xff] %v791
        %824 = vst [vmem:[%s234 + $0xf8] sm:$0xff] %v792
        %s825 = sand.u32 %s142, 1
        %s826 = scalar_lea.sflag [#allocation3], %s825
        %s827 = sand.u32 %s142, 1
        %s828 = smul.addr %s827, 256
        %s829 = scalar_lea.vmem [#allocation2], %s828
        // Predicated region
        $region41: #{bottleneck_forward_pallas.5} parent=39 // pred_check
          %p830 = pneg %p152
        $region42: #{bottleneck_forward_pallas.5} parent=39 // pred_check_branch
          %832 = sbr.rel (%p830) target = $region44
        $region43: #{bottleneck_forward_pallas.5} parent=39 // pred_region
          %s833 = smul.u32 32, %s19
          %s835 = ssub.s32 4096, 4096
          %836 = vsyncadd %s826, %s835
          %s837 = smul.addr %s833, 128
          %s838 = scalar_lea.hbm %s5, %s837
          %s839 = sshll.u32 %s829, 4
          %s840 = int_to_ptr.vmem [resolvable:$true] %s839
          %845 = dma.vmem_to_hbm [thread:$0]  %s840, 4096, %s838, %s826, 128, 128, 8
        $region44: #{bottleneck_forward_pallas.5} parent=39 // pred_fallthru
          _
      $region40: #{bottleneck_forward_pallas.5} parent=5 // pred_fallthru
        _
      %p846 = scmp.le.s32.totalorder 2, %s14
      // Predicated region
      $region45: #{bottleneck_forward_pallas.5} parent=5 // pred_check
        %p847 = pneg %p846
      $region46: #{bottleneck_forward_pallas.5} parent=5 // pred_check_branch
        %849 = sbr.rel (%p847) target = $region48
      $region47: #{bottleneck_forward_pallas.5} parent=5 // pred_region
        %s850 = ssub.s32 %s14, 2
        // Predicated region
        $region49: #{bottleneck_forward_pallas.5} parent=47 // pred_check
          %p851 = pneg %p158
        $region50: #{bottleneck_forward_pallas.5} parent=47 // pred_check_branch
          %853 = sbr.rel (%p851) target = $region52
        $region51: #{bottleneck_forward_pallas.5} parent=47 // pred_region
          %s854 = sand.u32 %s143, 1
          %s855 = scalar_lea.sflag [#allocation3], %s854
          %s856 = sand.u32 %s143, 1
          %s857 = smul.addr %s856, 256
          %s858 = scalar_lea.vmem [#allocation2], %s857
          %859 = dma.done %s855, 4096
        $region52: #{bottleneck_forward_pallas.5} parent=47 // pred_fallthru
          _
      $region48: #{bottleneck_forward_pallas.5} parent=5 // pred_fallthru
        _
    $region6: #{bottleneck_forward_pallas.5} parent=1 // loop_footer
      %s18 = sadd.s32 1, %s14
    $region7: #{bottleneck_forward_pallas.5} parent=1 // loop_footer_branch
      %13 = sbr.rel target = $region3
    $region8: #{bottleneck_forward_pallas.5} parent=1 // loop_exit
      _
    %860 = vsyncpa [#allocation3], 1
    %s861 = scalar_lea.sflag [#allocation3], 1
    %862 = vsyncpa %s861, 1

</llo_original>
